<compile_context>
chip_gen: v5e
topology: v5e:2x2
jax: 0.10.0
libtpu: 0.0.40
codegen_flags: <defaults>
</compile_context>

<pallas_src>
import math

import jax
import jax.numpy as jnp
from jax.experimental import pallas as pl
from jax.experimental.pallas import tpu as pltpu

_EPS = 1e-5          # nn.InstanceNorm2d default eps
_NEG_SLOPE = 0.2     # nn.LeakyReLU(0.2)
_INV_SQRT2 = 1.0 / math.sqrt(2.0)
_TAPS = tuple((dy, dx) for dy in (-1, 0, 1) for dx in (-1, 0, 1))


def _pool_chunk_rows(H, W, target_lanes=512):
    """Row-pairs per pool chunk so the selection matrix stays small (O(W*target))."""
    Ho = H // 2
    P = max(1, min(Ho, target_lanes // (2 * W)))
    while Ho % P:
        P -= 1
    return P


# --------------------------------------------------------------------------- fused kernel

def _make_resblk_kernel(*, normalize, downsample, learned_sc, H, W, P):
    Ho, Wo = (H // 2, W // 2) if downsample else (H, W)
    HW = H * W
    inv_hw = 1.0 / HW
    inv_hwo = 1.0 / (Ho * Wo)

    def _lrelu(v):
        return jnp.maximum(v, _NEG_SLOPE * v)

    def _inorm(v, g_ref, b_ref, inv_n):
        # One-pass stats: E[x], E[x^2]; biased variance (matches PyTorch InstanceNorm2d).
        mean = jnp.sum(v, axis=1, keepdims=True) * inv_n
        meansq = jnp.sum(v * v, axis=1, keepdims=True) * inv_n
        var = meansq - mean * mean
        return (v - mean) * jax.lax.rsqrt(var + _EPS) * g_ref[...] + b_ref[...]

    def _pool(v, pm):
        # (C, H*W) -> (C, Ho*Wo): 2x2 avg pool, one small MXU matmul per chunk of
        # P row-pairs against the precomputed (2*P*W, P*Wo) 0.25-selection matrix.
        lanes_in = 2 * P * W
        pieces = []
        for ch in range(Ho // P):
            blk = v[:, ch * lanes_in:(ch + 1) * lanes_in]
            pieces.append(jax.lax.dot_general(
                blk, pm, dimension_numbers=(((1,), (0,)), ((), ())),
                preferred_element_type=jnp.float32))
        return pieces[0] if len(pieces) == 1 else jnp.concatenate(pieces, axis=1)

    def _conv3x3(v, w_ref, b_ref, m_ref, ww):
        # v: (Cin, hw) activated input; 'same' 3x3 conv, zero padding via hoisted masks.
        cin, hw = v.shape
        taps = []
        for k, (dy, dx) in enumerate(_TAPS):
            s = dy * ww + dx
            # t[ci, p] = v[ci, p + s] (circular roll; wrapped entries zeroed by mask)
            t = v if s == 0 else pltpu.roll(v, shift=(-s) % hw, axis=1)
            if not (dy == 0 and dx == 0):
                t = t * m_ref[k:k + 1, :]
            taps.append(t)

        wmat = w_ref[...]                              # (Cout, 9*Cin)
        if cin % 8 == 0 and 9 * cin <= 256:
            # Small K: single im2col matmul (sublane concat is tile-aligned).
            xcol = jnp.concatenate(taps, axis=0)       # (9*Cin, hw)
            out = jax.lax.dot_general(
                wmat, xcol, dimension_numbers=(((1,), (0,)), ((), ())),
                preferred_element_type=jnp.float32)
        else:
            # Large Cin: 9 accumulated matmuls, no 9x-replicated activation copy.
            out = jax.lax.dot_general(
                wmat[:, :cin], taps[0],
                dimension_numbers=(((1,), (0,)), ((), ())),
                preferred_element_type=jnp.float32)
            for k in range(1, 9):
                out = out + jax.lax.dot_general(
                    wmat[:, k * cin:(k + 1) * cin], taps[k],
                    dimension_numbers=(((1,), (0,)), ((), ())),
                    preferred_element_type=jnp.float32)
        return out + b_ref[...]                        # (Cout, 1) bias broadcast

    def kernel(*refs):
        i = 0
        x_ref = refs[i]; i += 1
        w1_ref = refs[i]; i += 1
        b1_ref = refs[i]; i += 1
        w2_ref = refs[i]; i += 1
        b2_ref = refs[i]; i += 1
        wsc_ref = None
        if learned_sc:
            wsc_ref = refs[i]; i += 1
        g1_ref = be1_ref = g2_ref = be2_ref = None
        if normalize:
            g1_ref, be1_ref, g2_ref, be2_ref = refs[i:i + 4]
            i += 4
        m1_ref = refs[i]; i += 1
        m2_ref = m1_ref
        pm = None
        if downsample:
            m2_ref = refs[i]; i += 1
            pm = refs[i][...]; i += 1                  # load pool matrix once per step
        o_ref = refs[i]

        x = x_ref[0].astype(jnp.float32)               # (Cin, H*W), lane-dense

        # ---- shortcut: pool BEFORE the 1x1 (both linear => identical, 4x fewer pixels)
        sc = x
        if downsample:
            sc = _pool(sc, pm)
        if learned_sc:
            sc = jax.lax.dot_general(
                wsc_ref[...], sc, dimension_numbers=(((1,), (0,)), ((), ())),
                preferred_element_type=jnp.float32)

        # ---- residual
        r = x
        if normalize:
            r = _inorm(r, g1_ref, be1_ref, inv_hw)
        r = _lrelu(r)
        r = _conv3x3(r, w1_ref, b1_ref, m1_ref, W)
        if downsample:
            r = _pool(r, pm)
        if normalize:
            r = _inorm(r, g2_ref, be2_ref, inv_hwo)
        r = _lrelu(r)
        r = _conv3x3(r, w2_ref, b2_ref, m2_ref, Wo)

        o_ref[0] = ((sc + r) * _INV_SQRT2).astype(o_ref.dtype)

    return kernel


# --------------------------------------------------------------------------- one-time prep

def _boundary_masks(Hh, Ww, dtype):
    pid = jnp.arange(Hh * Ww, dtype=jnp.int32)
    row = pid // Ww
    col = pid % Ww
    rows = []
    for dy, dx in _TAPS:
        ok = (row + dy >= 0) & (row + dy < Hh) & (col + dx >= 0) & (col + dx < Ww)
        rows.append(ok)
    return jnp.stack(rows, axis=0).astype(dtype)       # (9, Hh*Ww)


def _pool_matrix_chunk(P, W, dtype):
    # (2*P*W, P*(W//2)) averaging matrix for P row-pairs (block of the full pool op).
    Wo = W // 2
    i = jnp.arange(2 * P * W)
    j = jnp.arange(P * Wo)
    same_r = (i[:, None] // W) // 2 == (j[None, :] // Wo)
    same_c = (i[:, None] % W) // 2 == (j[None, :] % Wo)
    return (same_r & same_c).astype(dtype) * 0.25


def prepare_params(raw, H, W, *, normalize, downsample, learned_sc, dtype=jnp.float32):
    """Re-lay-out PyTorch-style weights + precompute masks/pool matrix (hoisted)."""
    C1, Cin = raw["w1"].shape[:2]                      # conv1: Cin -> C1 (general)
    Cout, C2in = raw["w2"].shape[:2]                   # conv2: C2in -> Cout
    Ho, Wo = (H // 2, W // 2) if downsample else (H, W)
    prep = {
        # OIHW -> (Cout, 9*Cin) with column index (kh*3+kw)*Cin + ci
        "w1": jnp.transpose(raw["w1"], (0, 2, 3, 1)).reshape(C1, 9 * Cin).astype(dtype),
        "b1": raw["b1"].reshape(C1, 1).astype(dtype),
        "w2": jnp.transpose(raw["w2"], (0, 2, 3, 1)).reshape(Cout, 9 * C2in).astype(dtype),
        "b2": raw["b2"].reshape(Cout, 1).astype(dtype),
        "masks1": _boundary_masks(H, W, dtype),        # (9, H*W)
    }
    if learned_sc:
        prep["wsc"] = raw["w_sc"].reshape(Cout, Cin).astype(dtype)
    if normalize:
        prep["g1"] = raw["g1"].reshape(-1, 1).astype(dtype)
        prep["be1"] = raw["be1"].reshape(-1, 1).astype(dtype)
        prep["g2"] = raw["g2"].reshape(-1, 1).astype(dtype)
        prep["be2"] = raw["be2"].reshape(-1, 1).astype(dtype)
    if downsample:
        prep["masks2"] = _boundary_masks(Ho, Wo, dtype)
        prep["pm"] = _pool_matrix_chunk(_pool_chunk_rows(H, W), W, dtype)
    return prep


# --------------------------------------------------------------------------- forward

def resblk_forward_pallas(x_nchw, prep, *, normalize, downsample, learned_sc):
    N, Cin, H, W = x_nchw.shape
    HW = H * W
    Ho, Wo = (H // 2, W // 2) if downsample else (H, W)
    Cout = prep["w2"].shape[0]
    P = _pool_chunk_rows(H, W) if downsample else 1

    x = x_nchw.reshape(N, Cin, HW)                     # free reshape, stays NC(HW)

    args = [x, prep["w1"], prep["b1"], prep["w2"], prep["b2"]]
    in_specs = [
        pl.BlockSpec((1, Cin, HW), lambda n: (n, 0, 0)),
        pl.BlockSpec(prep["w1"].shape, lambda n: (0, 0)),
        pl.BlockSpec(prep["b1"].shape, lambda n: (0, 0)),
        pl.BlockSpec(prep["w2"].shape, lambda n: (0, 0)),
        pl.BlockSpec(prep["b2"].shape, lambda n: (0, 0)),
    ]
    if learned_sc:
        args.append(prep["wsc"])
        in_specs.append(pl.BlockSpec(prep["wsc"].shape, lambda n: (0, 0)))
    if normalize:
        for name in ("g1", "be1", "g2", "be2"):
            args.append(prep[name])
            in_specs.append(pl.BlockSpec(prep[name].shape, lambda n: (0, 0)))
    args.append(prep["masks1"])
    in_specs.append(pl.BlockSpec(prep["masks1"].shape, lambda n: (0, 0)))
    if downsample:
        args.append(prep["masks2"])
        in_specs.append(pl.BlockSpec(prep["masks2"].shape, lambda n: (0, 0)))
        args.append(prep["pm"])
        in_specs.append(pl.BlockSpec(prep["pm"].shape, lambda n: (0, 0)))

    out = pl.pallas_call(
        _make_resblk_kernel(normalize=normalize, downsample=downsample,
                            learned_sc=learned_sc, H=H, W=W, P=P),
        out_shape=jax.ShapeDtypeStruct((N, Cout, Ho * Wo), x_nchw.dtype),
        grid=(N,),
        in_specs=in_specs,
        out_specs=pl.BlockSpec((1, Cout, Ho * Wo), lambda n: (n, 0, 0)),
        compiler_params=pltpu.CompilerParams(
            dimension_semantics=("parallel",),         # shard batch over v7x's 2 TCs
            vmem_limit_bytes=48 * 1024 * 1024),        # < v7x 64 MiB physical VMEM
    )(*args)
    return out.reshape(N, Cout, Ho, Wo)                # back to NCHW


# --------------------------------------------------------------------------- pure-JAX reference

def resblk_forward_ref(x, params, *, normalize, downsample, learned_sc):
    def lrelu(v):
        return jnp.maximum(v, _NEG_SLOPE * v)

    def conv(v, w, b=None, pad=1):
        y = jax.lax.conv_general_dilated(v, w, (1, 1), [(pad, pad), (pad, pad)],
                                         dimension_numbers=("NCHW", "OIHW", "NCHW"))
        if b is not None:
            y = y + b[None, :, None, None]
        return y

    def inorm(v, g, b):
        m = jnp.mean(v, axis=(2, 3), keepdims=True)
        va = jnp.mean((v - m) ** 2, axis=(2, 3), keepdims=True)
        return (v - m) / jnp.sqrt(va + _EPS) * g[None, :, None, None] + b[None, :, None, None]

    def pool(v):
        n, c, h, w = v.shape
        return v.reshape(n, c, h // 2, 2, w // 2, 2).mean(axis=(3, 5))

    sc = x
    if learned_sc:
        sc = conv(sc, params["w_sc"], None, pad=0)
    if downsample:
        sc = pool(sc)

    r = x
    if normalize:
        r = inorm(r, params["g1"], params["be1"])
    r = lrelu(r)
    r = conv(r, params["w1"], params["b1"])
    if downsample:
        r = pool(r)
    if normalize:
        r = inorm(r, params["g2"], params["be2"])
    r = lrelu(r)
    r = conv(r, params["w2"], params["b2"])
    return (sc + r) / math.sqrt(2.0)


# --------------------------------------------------------------------------- main

if __name__ == "__main__":
    dim_in, dim_out = 8, 16            # learned_sc=True; Cin % 8 == 0 -> aligned im2col
    N, H, W = 2, 16, 16
    normalize, downsample = True, True
    learned_sc = dim_in != dim_out

    key = jax.random.PRNGKey(0)
    ks = jax.random.split(key, 10)
    f32 = jnp.float32
    raw = {
        "w1":   (0.1 * jax.random.normal(ks[0], (dim_in, dim_in, 3, 3))).astype(f32),
        "b1":   (0.1 * jax.random.normal(ks[1], (dim_in,))).astype(f32),
        "w2":   (0.1 * jax.random.normal(ks[2], (dim_out, dim_in, 3, 3))).astype(f32),
        "b2":   (0.1 * jax.random.normal(ks[3], (dim_out,))).astype(f32),
        "w_sc": (0.1 * jax.random.normal(ks[4], (dim_out, dim_in, 1, 1))).astype(f32),
        "g1":   (1.0 + 0.1 * jax.random.normal(ks[5], (dim_in,))).astype(f32),
        "be1":  (0.1 * jax.random.normal(ks[6], (dim_in,))).astype(f32),
        "g2":   (1.0 + 0.1 * jax.random.normal(ks[7], (dim_in,))).astype(f32),
        "be2":  (0.1 * jax.random.normal(ks[8], (dim_in,))).astype(f32),
    }
    x = jax.random.normal(ks[9], (N, dim_in, H, W)).astype(f32)   # NCHW, like PyTorch

    prep = prepare_params(raw, H, W, normalize=normalize,
                          downsample=downsample, learned_sc=learned_sc)

    out = resblk_forward_pallas(x, prep, normalize=normalize,
                                downsample=downsample, learned_sc=learned_sc)
    out = jax.block_until_ready(out)

    ref = resblk_forward_ref(x, raw, normalize=normalize,
                             downsample=downsample, learned_sc=learned_sc)
    ref = jax.block_until_ready(ref)

    assert out.shape == (N, dim_out, H // 2, W // 2), out.shape
    err = float(jnp.max(jnp.abs(out - ref)))
    assert err < 5e-4, f"max abs error {err}"
    print("KERNEL_OK")
</pallas_src>

<mosaic_0001>
module attributes {stable_mosaic.version = 11 : i64} {
  func.func @kernel(%arg0: i32, %arg1: memref<1x8x256xf32, #tpu.memory_space<vmem>>, %arg2: memref<8x72xf32, #tpu.memory_space<vmem>>, %arg3: memref<8x1xf32, #tpu.memory_space<vmem>>, %arg4: memref<16x72xf32, #tpu.memory_space<vmem>>, %arg5: memref<16x1xf32, #tpu.memory_space<vmem>>, %arg6: memref<16x8xf32, #tpu.memory_space<vmem>>, %arg7: memref<8x1xf32, #tpu.memory_space<vmem>>, %arg8: memref<8x1xf32, #tpu.memory_space<vmem>>, %arg9: memref<8x1xf32, #tpu.memory_space<vmem>>, %arg10: memref<8x1xf32, #tpu.memory_space<vmem>>, %arg11: memref<9x256xf32, #tpu.memory_space<vmem>>, %arg12: memref<9x64xf32, #tpu.memory_space<vmem>>, %arg13: memref<256x64xf32, #tpu.memory_space<vmem>>, %arg14: memref<1x16x64xf32, #tpu.memory_space<vmem>>) attributes {dimension_semantics = [#tpu.dimension_semantics<parallel>], iteration_bounds = array<i64: 2>, scalar_prefetch = 0 : i64, scratch_operands = 0 : i64, tpu.core_type = #tpu.core_type<tc>, window_params = [{transform_indices = @transform_0, window_bounds = array<i64: 1, 8, 256>}, {pipeline_mode = #tpu.pipeline_mode<synchronous>, transform_indices = @transform_1, window_bounds = array<i64: 8, 72>}, {pipeline_mode = #tpu.pipeline_mode<synchronous>, transform_indices = @transform_2, window_bounds = array<i64: 8, 1>}, {pipeline_mode = #tpu.pipeline_mode<synchronous>, transform_indices = @transform_3, window_bounds = array<i64: 16, 72>}, {pipeline_mode = #tpu.pipeline_mode<synchronous>, transform_indices = @transform_4, window_bounds = array<i64: 16, 1>}, {pipeline_mode = #tpu.pipeline_mode<synchronous>, transform_indices = @transform_5, window_bounds = array<i64: 16, 8>}, {pipeline_mode = #tpu.pipeline_mode<synchronous>, transform_indices = @transform_6, window_bounds = array<i64: 8, 1>}, {pipeline_mode = #tpu.pipeline_mode<synchronous>, transform_indices = @transform_7, window_bounds = array<i64: 8, 1>}, {pipeline_mode = #tpu.pipeline_mode<synchronous>, transform_indices = @transform_8, window_bounds = array<i64: 8, 1>}, {pipeline_mode = #tpu.pipeline_mode<synchronous>, transform_indices = @transform_9, window_bounds = array<i64: 8, 1>}, {pipeline_mode = #tpu.pipeline_mode<synchronous>, transform_indices = @transform_10, window_bounds = array<i64: 9, 256>}, {pipeline_mode = #tpu.pipeline_mode<synchronous>, transform_indices = @transform_11, window_bounds = array<i64: 9, 64>}, {pipeline_mode = #tpu.pipeline_mode<synchronous>, transform_indices = @transform_12, window_bounds = array<i64: 256, 64>}, {transform_indices = @transform_13, window_bounds = array<i64: 1, 16, 64>}]} {
    %c0 = arith.constant 0 : index
    %c0_0 = arith.constant 0 : index
    %0 = vector.load %arg13[%c0, %c0_0] : memref<256x64xf32, #tpu.memory_space<vmem>>, vector<256x64xf32>
    %c0_1 = arith.constant 0 : index
    %c0_2 = arith.constant 0 : index
    %c0_3 = arith.constant 0 : index
    %1 = vector.load %arg1[%c0_1, %c0_2, %c0_3] : memref<1x8x256xf32, #tpu.memory_space<vmem>>, vector<1x8x256xf32>
    %2 = vector.shape_cast %1 : vector<1x8x256xf32> to vector<8x256xf32>
    %cst = arith.constant dense<0.000000e+00> : vector<8x64xf32>
    %3 = tpu.matmul %2, %0, %cst {dimension_numbers = #tpu.dot_dimension_numbers<[1], [0], [0], [1], [0, 0, 1, 1], [], []>} : vector<8x256xf32>, vector<256x64xf32>, vector<8x64xf32> -> vector<8x64xf32>
    %c0_4 = arith.constant 0 : index
    %c0_5 = arith.constant 0 : index
    %4 = vector.load %arg6[%c0_4, %c0_5] : memref<16x8xf32, #tpu.memory_space<vmem>>, vector<16x8xf32>
    %cst_6 = arith.constant dense<0.000000e+00> : vector<16x64xf32>
    %5 = tpu.matmul %4, %3, %cst_6 {dimension_numbers = #tpu.dot_dimension_numbers<[1], [0], [0], [1], [0, 0, 1, 1], [], []>} : vector<16x8xf32>, vector<8x64xf32>, vector<16x64xf32> -> vector<16x64xf32>
    %cst_7 = arith.constant dense<0.000000e+00> : vector<8xf32>
    %6 = vector.multi_reduction <add>, %2, %cst_7 [1] : vector<8x256xf32> to vector<8xf32>
    %7 = vector.shape_cast %6 : vector<8xf32> to vector<8x1xf32>
    %cst_8 = arith.constant 3.906250e-03 : f32
    %8 = vector.broadcast %cst_8 : f32 to vector<8x1xf32>
    %9 = arith.mulf %7, %8 : vector<8x1xf32>
    %10 = arith.mulf %2, %2 : vector<8x256xf32>
    %cst_9 = arith.constant dense<0.000000e+00> : vector<8xf32>
    %11 = vector.multi_reduction <add>, %10, %cst_9 [1] : vector<8x256xf32> to vector<8xf32>
    %12 = vector.shape_cast %11 : vector<8xf32> to vector<8x1xf32>
    %cst_10 = arith.constant 3.906250e-03 : f32
    %13 = vector.broadcast %cst_10 : f32 to vector<8x1xf32>
    %14 = arith.mulf %12, %13 : vector<8x1xf32>
    %15 = arith.mulf %9, %9 : vector<8x1xf32>
    %16 = arith.subf %14, %15 : vector<8x1xf32>
    %17 = vector.broadcast %9 : vector<8x1xf32> to vector<8x256xf32>
    %18 = arith.subf %2, %17 : vector<8x256xf32>
    %cst_11 = arith.constant 9.99999974E-6 : f32
    %19 = vector.broadcast %cst_11 : f32 to vector<8x1xf32>
    %20 = arith.addf %16, %19 : vector<8x1xf32>
    %21 = math.rsqrt %20 : vector<8x1xf32>
    %22 = vector.broadcast %21 : vector<8x1xf32> to vector<8x256xf32>
    %23 = arith.mulf %18, %22 : vector<8x256xf32>
    %c0_12 = arith.constant 0 : index
    %c0_13 = arith.constant 0 : index
    %24 = vector.load %arg7[%c0_12, %c0_13] : memref<8x1xf32, #tpu.memory_space<vmem>>, vector<8x1xf32>
    %25 = vector.broadcast %24 : vector<8x1xf32> to vector<8x256xf32>
    %26 = arith.mulf %23, %25 : vector<8x256xf32>
    %c0_14 = arith.constant 0 : index
    %c0_15 = arith.constant 0 : index
    %27 = vector.load %arg8[%c0_14, %c0_15] : memref<8x1xf32, #tpu.memory_space<vmem>>, vector<8x1xf32>
    %28 = vector.broadcast %27 : vector<8x1xf32> to vector<8x256xf32>
    %29 = arith.addf %26, %28 : vector<8x256xf32>
    %cst_16 = arith.constant 2.000000e-01 : f32
    %30 = vector.broadcast %cst_16 : f32 to vector<8x256xf32>
    %31 = arith.mulf %30, %29 : vector<8x256xf32>
    %32 = arith.maximumf %29, %31 : vector<8x256xf32>
    %c17_i32 = arith.constant 17 : i32
    %33 = tpu.dynamic_rotate %32 by %c17_i32 dim 1 : vector<8x256xf32>, i32 -> vector<8x256xf32>
    %c0_17 = arith.constant 0 : index
    %c0_18 = arith.constant 0 : index
    %34 = vector.load %arg11[%c0_17, %c0_18] : memref<9x256xf32, #tpu.memory_space<vmem>>, vector<1x256xf32>
    %35 = vector.broadcast %34 : vector<1x256xf32> to vector<8x256xf32>
    %36 = arith.mulf %33, %35 : vector<8x256xf32>
    %c16_i32 = arith.constant 16 : i32
    %37 = tpu.dynamic_rotate %32 by %c16_i32 dim 1 : vector<8x256xf32>, i32 -> vector<8x256xf32>
    %c1 = arith.constant 1 : index
    %c0_19 = arith.constant 0 : index
    %38 = vector.load %arg11[%c1, %c0_19] : memref<9x256xf32, #tpu.memory_space<vmem>>, vector<1x256xf32>
    %39 = vector.broadcast %38 : vector<1x256xf32> to vector<8x256xf32>
    %40 = arith.mulf %37, %39 : vector<8x256xf32>
    %c15_i32 = arith.constant 15 : i32
    %41 = tpu.dynamic_rotate %32 by %c15_i32 dim 1 : vector<8x256xf32>, i32 -> vector<8x256xf32>
    %c2 = arith.constant 2 : index
    %c0_20 = arith.constant 0 : index
    %42 = vector.load %arg11[%c2, %c0_20] : memref<9x256xf32, #tpu.memory_space<vmem>>, vector<1x256xf32>
    %43 = vector.broadcast %42 : vector<1x256xf32> to vector<8x256xf32>
    %44 = arith.mulf %41, %43 : vector<8x256xf32>
    %c1_i32 = arith.constant 1 : i32
    %45 = tpu.dynamic_rotate %32 by %c1_i32 dim 1 : vector<8x256xf32>, i32 -> vector<8x256xf32>
    %c3 = arith.constant 3 : index
    %c0_21 = arith.constant 0 : index
    %46 = vector.load %arg11[%c3, %c0_21] : memref<9x256xf32, #tpu.memory_space<vmem>>, vector<1x256xf32>
    %47 = vector.broadcast %46 : vector<1x256xf32> to vector<8x256xf32>
    %48 = arith.mulf %45, %47 : vector<8x256xf32>
    %c255_i32 = arith.constant 255 : i32
    %49 = tpu.dynamic_rotate %32 by %c255_i32 dim 1 : vector<8x256xf32>, i32 -> vector<8x256xf32>
    %c5 = arith.constant 5 : index
    %c0_22 = arith.constant 0 : index
    %50 = vector.load %arg11[%c5, %c0_22] : memref<9x256xf32, #tpu.memory_space<vmem>>, vector<1x256xf32>
    %51 = vector.broadcast %50 : vector<1x256xf32> to vector<8x256xf32>
    %52 = arith.mulf %49, %51 : vector<8x256xf32>
    %c241_i32 = arith.constant 241 : i32
    %53 = tpu.dynamic_rotate %32 by %c241_i32 dim 1 : vector<8x256xf32>, i32 -> vector<8x256xf32>
    %c6 = arith.constant 6 : index
    %c0_23 = arith.constant 0 : index
    %54 = vector.load %arg11[%c6, %c0_23] : memref<9x256xf32, #tpu.memory_space<vmem>>, vector<1x256xf32>
    %55 = vector.broadcast %54 : vector<1x256xf32> to vector<8x256xf32>
    %56 = arith.mulf %53, %55 : vector<8x256xf32>
    %c240_i32 = arith.constant 240 : i32
    %57 = tpu.dynamic_rotate %32 by %c240_i32 dim 1 : vector<8x256xf32>, i32 -> vector<8x256xf32>
    %c7 = arith.constant 7 : index
    %c0_24 = arith.constant 0 : index
    %58 = vector.load %arg11[%c7, %c0_24] : memref<9x256xf32, #tpu.memory_space<vmem>>, vector<1x256xf32>
    %59 = vector.broadcast %58 : vector<1x256xf32> to vector<8x256xf32>
    %60 = arith.mulf %57, %59 : vector<8x256xf32>
    %c239_i32 = arith.constant 239 : i32
    %61 = tpu.dynamic_rotate %32 by %c239_i32 dim 1 : vector<8x256xf32>, i32 -> vector<8x256xf32>
    %c8 = arith.constant 8 : index
    %c0_25 = arith.constant 0 : index
    %62 = vector.load %arg11[%c8, %c0_25] : memref<9x256xf32, #tpu.memory_space<vmem>>, vector<1x256xf32>
    %63 = vector.broadcast %62 : vector<1x256xf32> to vector<8x256xf32>
    %64 = arith.mulf %61, %63 : vector<8x256xf32>
    %c0_26 = arith.constant 0 : index
    %c0_27 = arith.constant 0 : index
    %65 = vector.load %arg2[%c0_26, %c0_27] : memref<8x72xf32, #tpu.memory_space<vmem>>, vector<8x72xf32>
    %66 = tpu.concatenate %36, %40, %44, %48, %32, %52, %56, %60, %64 in 0 : vector<8x256xf32>, vector<8x256xf32>, vector<8x256xf32>, vector<8x256xf32>, vector<8x256xf32>, vector<8x256xf32>, vector<8x256xf32>, vector<8x256xf32>, vector<8x256xf32> -> vector<72x256xf32>
    %cst_28 = arith.constant dense<0.000000e+00> : vector<8x256xf32>
    %67 = tpu.matmul %65, %66, %cst_28 {dimension_numbers = #tpu.dot_dimension_numbers<[1], [0], [0], [1], [0, 0, 1, 1], [], []>} : vector<8x72xf32>, vector<72x256xf32>, vector<8x256xf32> -> vector<8x256xf32>
    %c0_29 = arith.constant 0 : index
    %c0_30 = arith.constant 0 : index
    %68 = vector.load %arg3[%c0_29, %c0_30] : memref<8x1xf32, #tpu.memory_space<vmem>>, vector<8x1xf32>
    %69 = vector.broadcast %68 : vector<8x1xf32> to vector<8x256xf32>
    %70 = arith.addf %67, %69 : vector<8x256xf32>
    %cst_31 = arith.constant dense<0.000000e+00> : vector<8x64xf32>
    %71 = tpu.matmul %70, %0, %cst_31 {dimension_numbers = #tpu.dot_dimension_numbers<[1], [0], [0], [1], [0, 0, 1, 1], [], []>} : vector<8x256xf32>, vector<256x64xf32>, vector<8x64xf32> -> vector<8x64xf32>
    %cst_32 = arith.constant dense<0.000000e+00> : vector<8xf32>
    %72 = vector.multi_reduction <add>, %71, %cst_32 [1] : vector<8x64xf32> to vector<8xf32>
    %73 = vector.shape_cast %72 : vector<8xf32> to vector<8x1xf32>
    %cst_33 = arith.constant 1.562500e-02 : f32
    %74 = vector.broadcast %cst_33 : f32 to vector<8x1xf32>
    %75 = arith.mulf %73, %74 : vector<8x1xf32>
    %76 = arith.mulf %71, %71 : vector<8x64xf32>
    %cst_34 = arith.constant dense<0.000000e+00> : vector<8xf32>
    %77 = vector.multi_reduction <add>, %76, %cst_34 [1] : vector<8x64xf32> to vector<8xf32>
    %78 = vector.shape_cast %77 : vector<8xf32> to vector<8x1xf32>
    %cst_35 = arith.constant 1.562500e-02 : f32
    %79 = vector.broadcast %cst_35 : f32 to vector<8x1xf32>
    %80 = arith.mulf %78, %79 : vector<8x1xf32>
    %81 = arith.mulf %75, %75 : vector<8x1xf32>
    %82 = arith.subf %80, %81 : vector<8x1xf32>
    %83 = vector.broadcast %75 : vector<8x1xf32> to vector<8x64xf32>
    %84 = arith.subf %71, %83 : vector<8x64xf32>
    %cst_36 = arith.constant 9.99999974E-6 : f32
    %85 = vector.broadcast %cst_36 : f32 to vector<8x1xf32>
    %86 = arith.addf %82, %85 : vector<8x1xf32>
    %87 = math.rsqrt %86 : vector<8x1xf32>
    %88 = vector.broadcast %87 : vector<8x1xf32> to vector<8x64xf32>
    %89 = arith.mulf %84, %88 : vector<8x64xf32>
    %c0_37 = arith.constant 0 : index
    %c0_38 = arith.constant 0 : index
    %90 = vector.load %arg9[%c0_37, %c0_38] : memref<8x1xf32, #tpu.memory_space<vmem>>, vector<8x1xf32>
    %91 = vector.broadcast %90 : vector<8x1xf32> to vector<8x64xf32>
    %92 = arith.mulf %89, %91 : vector<8x64xf32>
    %c0_39 = arith.constant 0 : index
    %c0_40 = arith.constant 0 : index
    %93 = vector.load %arg10[%c0_39, %c0_40] : memref<8x1xf32, #tpu.memory_space<vmem>>, vector<8x1xf32>
    %94 = vector.broadcast %93 : vector<8x1xf32> to vector<8x64xf32>
    %95 = arith.addf %92, %94 : vector<8x64xf32>
    %cst_41 = arith.constant 2.000000e-01 : f32
    %96 = vector.broadcast %cst_41 : f32 to vector<8x64xf32>
    %97 = arith.mulf %96, %95 : vector<8x64xf32>
    %98 = arith.maximumf %95, %97 : vector<8x64xf32>
    %c9_i32 = arith.constant 9 : i32
    %99 = tpu.dynamic_rotate %98 by %c9_i32 dim 1 : vector<8x64xf32>, i32 -> vector<8x64xf32>
    %c0_42 = arith.constant 0 : index
    %c0_43 = arith.constant 0 : index
    %100 = vector.load %arg12[%c0_42, %c0_43] : memref<9x64xf32, #tpu.memory_space<vmem>>, vector<1x64xf32>
    %101 = vector.broadcast %100 : vector<1x64xf32> to vector<8x64xf32>
    %102 = arith.mulf %99, %101 : vector<8x64xf32>
    %c8_i32 = arith.constant 8 : i32
    %103 = tpu.dynamic_rotate %98 by %c8_i32 dim 1 : vector<8x64xf32>, i32 -> vector<8x64xf32>
    %c1_44 = arith.constant 1 : index
    %c0_45 = arith.constant 0 : index
    %104 = vector.load %arg12[%c1_44, %c0_45] : memref<9x64xf32, #tpu.memory_space<vmem>>, vector<1x64xf32>
    %105 = vector.broadcast %104 : vector<1x64xf32> to vector<8x64xf32>
    %106 = arith.mulf %103, %105 : vector<8x64xf32>
    %c7_i32 = arith.constant 7 : i32
    %107 = tpu.dynamic_rotate %98 by %c7_i32 dim 1 : vector<8x64xf32>, i32 -> vector<8x64xf32>
    %c2_46 = arith.constant 2 : index
    %c0_47 = arith.constant 0 : index
    %108 = vector.load %arg12[%c2_46, %c0_47] : memref<9x64xf32, #tpu.memory_space<vmem>>, vector<1x64xf32>
    %109 = vector.broadcast %108 : vector<1x64xf32> to vector<8x64xf32>
    %110 = arith.mulf %107, %109 : vector<8x64xf32>
    %c1_i32_48 = arith.constant 1 : i32
    %111 = tpu.dynamic_rotate %98 by %c1_i32_48 dim 1 : vector<8x64xf32>, i32 -> vector<8x64xf32>
    %c3_49 = arith.constant 3 : index
    %c0_50 = arith.constant 0 : index
    %112 = vector.load %arg12[%c3_49, %c0_50] : memref<9x64xf32, #tpu.memory_space<vmem>>, vector<1x64xf32>
    %113 = vector.broadcast %112 : vector<1x64xf32> to vector<8x64xf32>
    %114 = arith.mulf %111, %113 : vector<8x64xf32>
    %c63_i32 = arith.constant 63 : i32
    %115 = tpu.dynamic_rotate %98 by %c63_i32 dim 1 : vector<8x64xf32>, i32 -> vector<8x64xf32>
    %c5_51 = arith.constant 5 : index
    %c0_52 = arith.constant 0 : index
    %116 = vector.load %arg12[%c5_51, %c0_52] : memref<9x64xf32, #tpu.memory_space<vmem>>, vector<1x64xf32>
    %117 = vector.broadcast %116 : vector<1x64xf32> to vector<8x64xf32>
    %118 = arith.mulf %115, %117 : vector<8x64xf32>
    %c57_i32 = arith.constant 57 : i32
    %119 = tpu.dynamic_rotate %98 by %c57_i32 dim 1 : vector<8x64xf32>, i32 -> vector<8x64xf32>
    %c6_53 = arith.constant 6 : index
    %c0_54 = arith.constant 0 : index
    %120 = vector.load %arg12[%c6_53, %c0_54] : memref<9x64xf32, #tpu.memory_space<vmem>>, vector<1x64xf32>
    %121 = vector.broadcast %120 : vector<1x64xf32> to vector<8x64xf32>
    %122 = arith.mulf %119, %121 : vector<8x64xf32>
    %c56_i32 = arith.constant 56 : i32
    %123 = tpu.dynamic_rotate %98 by %c56_i32 dim 1 : vector<8x64xf32>, i32 -> vector<8x64xf32>
    %c7_55 = arith.constant 7 : index
    %c0_56 = arith.constant 0 : index
    %124 = vector.load %arg12[%c7_55, %c0_56] : memref<9x64xf32, #tpu.memory_space<vmem>>, vector<1x64xf32>
    %125 = vector.broadcast %124 : vector<1x64xf32> to vector<8x64xf32>
    %126 = arith.mulf %123, %125 : vector<8x64xf32>
    %c55_i32 = arith.constant 55 : i32
    %127 = tpu.dynamic_rotate %98 by %c55_i32 dim 1 : vector<8x64xf32>, i32 -> vector<8x64xf32>
    %c8_57 = arith.constant 8 : index
    %c0_58 = arith.constant 0 : index
    %128 = vector.load %arg12[%c8_57, %c0_58] : memref<9x64xf32, #tpu.memory_space<vmem>>, vector<1x64xf32>
    %129 = vector.broadcast %128 : vector<1x64xf32> to vector<8x64xf32>
    %130 = arith.mulf %127, %129 : vector<8x64xf32>
    %c0_59 = arith.constant 0 : index
    %c0_60 = arith.constant 0 : index
    %131 = vector.load %arg4[%c0_59, %c0_60] : memref<16x72xf32, #tpu.memory_space<vmem>>, vector<16x72xf32>
    %132 = tpu.concatenate %102, %106, %110, %114, %98, %118, %122, %126, %130 in 0 : vector<8x64xf32>, vector<8x64xf32>, vector<8x64xf32>, vector<8x64xf32>, vector<8x64xf32>, vector<8x64xf32>, vector<8x64xf32>, vector<8x64xf32>, vector<8x64xf32> -> vector<72x64xf32>
    %cst_61 = arith.constant dense<0.000000e+00> : vector<16x64xf32>
    %133 = tpu.matmul %131, %132, %cst_61 {dimension_numbers = #tpu.dot_dimension_numbers<[1], [0], [0], [1], [0, 0, 1, 1], [], []>} : vector<16x72xf32>, vector<72x64xf32>, vector<16x64xf32> -> vector<16x64xf32>
    %c0_62 = arith.constant 0 : index
    %c0_63 = arith.constant 0 : index
    %134 = vector.load %arg5[%c0_62, %c0_63] : memref<16x1xf32, #tpu.memory_space<vmem>>, vector<16x1xf32>
    %135 = vector.broadcast %134 : vector<16x1xf32> to vector<16x64xf32>
    %136 = arith.addf %133, %135 : vector<16x64xf32>
    %137 = arith.addf %5, %136 : vector<16x64xf32>
    %cst_64 = arith.constant 0.707106769 : f32
    %138 = vector.broadcast %cst_64 : f32 to vector<16x64xf32>
    %139 = arith.mulf %137, %138 : vector<16x64xf32>
    %c0_65 = arith.constant 0 : index
    %c0_66 = arith.constant 0 : index
    %c0_67 = arith.constant 0 : index
    %140 = vector.load %arg14[%c0_65, %c0_66, %c0_67] : memref<1x16x64xf32, #tpu.memory_space<vmem>>, vector<1x16x64xf32>
    %141 = vector.shape_cast %140 : vector<1x16x64xf32> to vector<16x64xf32>
    %142 = vector.shape_cast %139 : vector<16x64xf32> to vector<1x16x64xf32>
    tpu.vector_store %arg14[%c0_65, %c0_66, %c0_67], %142 {strides = array<i32>} : memref<1x16x64xf32, #tpu.memory_space<vmem>>, vector<1x16x64xf32>,
    return
  }
  func.func @transform_0(%arg0: i32) -> (i32, i32, i32) {
    %c0_i32 = arith.constant 0 : i32
    %c0_i32_0 = arith.constant 0 : i32
    %c0_i32_1 = arith.constant 0 : i32
    return %arg0, %c0_i32, %c0_i32_0 : i32, i32, i32
  }
  func.func @transform_1(%arg0: i32) -> (i32, i32) {
    %c0_i32 = arith.constant 0 : i32
    %c0_i32_0 = arith.constant 0 : i32
    %c0_i32_1 = arith.constant 0 : i32
    return %c0_i32, %c0_i32_0 : i32, i32
  }
  func.func @transform_2(%arg0: i32) -> (i32, i32) {
    %c0_i32 = arith.constant 0 : i32
    %c0_i32_0 = arith.constant 0 : i32
    %c0_i32_1 = arith.constant 0 : i32
    return %c0_i32, %c0_i32_0 : i32, i32
  }
  func.func @transform_3(%arg0: i32) -> (i32, i32) {
    %c0_i32 = arith.constant 0 : i32
    %c0_i32_0 = arith.constant 0 : i32
    %c0_i32_1 = arith.constant 0 : i32
    return %c0_i32, %c0_i32_0 : i32, i32
  }
  func.func @transform_4(%arg0: i32) -> (i32, i32) {
    %c0_i32 = arith.constant 0 : i32
    %c0_i32_0 = arith.constant 0 : i32
    %c0_i32_1 = arith.constant 0 : i32
    return %c0_i32, %c0_i32_0 : i32, i32
  }
  func.func @transform_5(%arg0: i32) -> (i32, i32) {
    %c0_i32 = arith.constant 0 : i32
    %c0_i32_0 = arith.constant 0 : i32
    %c0_i32_1 = arith.constant 0 : i32
    return %c0_i32, %c0_i32_0 : i32, i32
  }
  func.func @transform_6(%arg0: i32) -> (i32, i32) {
    %c0_i32 = arith.constant 0 : i32
    %c0_i32_0 = arith.constant 0 : i32
    %c0_i32_1 = arith.constant 0 : i32
    return %c0_i32, %c0_i32_0 : i32, i32
  }
  func.func @transform_7(%arg0: i32) -> (i32, i32) {
    %c0_i32 = arith.constant 0 : i32
    %c0_i32_0 = arith.constant 0 : i32
    %c0_i32_1 = arith.constant 0 : i32
    return %c0_i32, %c0_i32_0 : i32, i32
  }
  func.func @transform_8(%arg0: i32) -> (i32, i32) {
    %c0_i32 = arith.constant 0 : i32
    %c0_i32_0 = arith.constant 0 : i32
    %c0_i32_1 = arith.constant 0 : i32
    return %c0_i32, %c0_i32_0 : i32, i32
  }
  func.func @transform_9(%arg0: i32) -> (i32, i32) {
    %c0_i32 = arith.constant 0 : i32
    %c0_i32_0 = arith.constant 0 : i32
    %c0_i32_1 = arith.constant 0 : i32
    return %c0_i32, %c0_i32_0 : i32, i32
  }
  func.func @transform_10(%arg0: i32) -> (i32, i32) {
    %c0_i32 = arith.constant 0 : i32
    %c0_i32_0 = arith.constant 0 : i32
    %c0_i32_1 = arith.constant 0 : i32
    return %c0_i32, %c0_i32_0 : i32, i32
  }
  func.func @transform_11(%arg0: i32) -> (i32, i32) {
    %c0_i32 = arith.constant 0 : i32
    %c0_i32_0 = arith.constant 0 : i32
    %c0_i32_1 = arith.constant 0 : i32
    return %c0_i32, %c0_i32_0 : i32, i32
  }
  func.func @transform_12(%arg0: i32) -> (i32, i32) {
    %c0_i32 = arith.constant 0 : i32
    %c0_i32_0 = arith.constant 0 : i32
    %c0_i32_1 = arith.constant 0 : i32
    return %c0_i32, %c0_i32_0 : i32, i32
  }
  func.func @transform_13(%arg0: i32) -> (i32, i32, i32) {
    %c0_i32 = arith.constant 0 : i32
    %c0_i32_0 = arith.constant 0 : i32
    %c0_i32_1 = arith.constant 0 : i32
    return %arg0, %c0_i32, %c0_i32_0 : i32, i32, i32
  }
}

</mosaic_0001>

<llo_original>
// kernel: tpu_custom_call.1
$region0: #{tpu_custom_call.1}
  #allocation0 [shape = 'u32[]', space=smem, size = 0x4, offset = 0x4, fixed_abs, tag = 'smem constant byte address 0x4 - core index']
  #allocation1 [shape = 'u32[72,128]{1,0:T(1,128)}', space=vmem, size = 0x9000, scoped, tag = 'internal scratch']
  %s0 = inlined_call_operand.vmem [shape: f32[2,8,256], index: 0, kind: input, shape index: {}]
  %s1 = inlined_call_operand.vmem [shape: f32[8,72], index: 1, kind: input, shape index: {}]
  %s2 = inlined_call_operand.vmem [shape: f32[8,1], index: 2, kind: input, shape index: {}]
  %s3 = inlined_call_operand.vmem [shape: f32[16,72], index: 3, kind: input, shape index: {}]
  %s4 = inlined_call_operand.vmem [shape: f32[16,1], index: 4, kind: input, shape index: {}]
  %s5 = inlined_call_operand.vmem [shape: f32[16,8], index: 5, kind: input, shape index: {}]
  %s6 = inlined_call_operand.vmem [shape: f32[8,1], index: 6, kind: input, shape index: {}]
  %s7 = inlined_call_operand.vmem [shape: f32[8,1], index: 7, kind: input, shape index: {}]
  %s8 = inlined_call_operand.vmem [shape: f32[8,1], index: 8, kind: input, shape index: {}]
  %s9 = inlined_call_operand.vmem [shape: f32[8,1], index: 9, kind: input, shape index: {}]
  %s10 = inlined_call_operand.vmem [shape: f32[9,256], index: 10, kind: input, shape index: {}]
  %s11 = inlined_call_operand.vmem [shape: f32[9,64], index: 11, kind: input, shape index: {}]
  %s12 = inlined_call_operand.vmem [shape: f32[256,64], index: 12, kind: input, shape index: {}]
  %s13 = inlined_call_operand.hbm [shape: f32[2,16,64], index: 13, kind: output, shape index: {}]
  %s14 = sld [smem:[#allocation0]]
  $region85: #{tpu_custom_call.1} parent=0
    _
  %s16 = ssub.s32 1, %s14
  %s17 = scalar_select 0, %s16, %s14
  $region1: #{tpu_custom_call.1} parent=0
    #allocation2 [shape = 'u8[16384]{0}', space=vmem, size = 0x4000, scoped, tag = 'output window, operand 0']
    #allocation3 [shape = 's32[2]{0}', space=sflag, size = 0x8, scoped, tag = 'scoped memory for tpu_custom_call.1']
    %18 = vsyncpa [#allocation3], 0
    %s19 = scalar_lea.sflag [#allocation3], 1
    %20 = vsyncpa %s19, 0
    loop: start=0, step=1, limit=4
    $region2: #{tpu_custom_call.1} parent=1 // loop_pre_header
      _
    $region3: #{tpu_custom_call.1} parent=1 // loop_header
      %s22 = sphi 0, %s26
      %p23 = scmp.ge.s32.totalorder %s22, 4
      %s32 = sphi 0, %s34
      %s35 = sphi 0, %s32
      %s36 = sphi 0, %s35
      %s52 = sphi 0, %s36
      %s56 = sphi 0, %s56
      %s58 = sphi 0, %s56
      %s59 = sphi 0, %s58
      %s73 = sphi 0, %s59
      %s77 = sphi 0, %s77
      %s79 = sphi 0, %s77
      %s80 = sphi 0, %s79
      %s94 = sphi 0, %s80
      %s98 = sphi 0, %s98
      %s100 = sphi 0, %s98
      %s101 = sphi 0, %s100
      %s115 = sphi 0, %s101
      %s119 = sphi 0, %s119
      %s121 = sphi 0, %s119
      %s122 = sphi 0, %s121
      %s136 = sphi 0, %s122
      %s140 = sphi 0, %s140
      %s142 = sphi 0, %s140
      %s143 = sphi 0, %s142
      %s157 = sphi 0, %s143
      %s161 = sphi 0, %s161
      %s163 = sphi 0, %s161
      %s164 = sphi 0, %s163
      %s178 = sphi 0, %s164
      %s182 = sphi 0, %s182
      %s184 = sphi 0, %s182
      %s185 = sphi 0, %s184
      %s199 = sphi 0, %s185
      %s203 = sphi 0, %s203
      %s205 = sphi 0, %s203
      %s206 = sphi 0, %s205
      %s220 = sphi 0, %s206
      %s224 = sphi 0, %s224
      %s226 = sphi 0, %s224
      %s227 = sphi 0, %s226
      %s241 = sphi 0, %s227
      %s245 = sphi 0, %s245
      %s247 = sphi 0, %s245
      %s248 = sphi 0, %s247
      %s262 = sphi 0, %s248
      %s266 = sphi 0, %s266
      %s268 = sphi 0, %s266
      %s269 = sphi 0, %s268
      %s283 = sphi 0, %s269
      %s287 = sphi 0, %s287
      %s289 = sphi 0, %s287
      %s290 = sphi 0, %s289
      %s304 = sphi 0, %s290
      %s310 = sphi 0, %s312
      %s313 = sphi 0, %s310
      %s314 = sphi 0, %s313
      %s330 = sphi 0, %s314
    $region4: #{tpu_custom_call.1} parent=1 // loop_header_branch
      %25 = sbr.rel (%p23) target = $region8
    $region5: #{tpu_custom_call.1} parent=1 // loop_body
      %s27 = ssub.s32 %s22, 1
      %s28 = ssub.s32 %s22, 2
      %s29 = sadd.s32 %s22, 1
      %s30 = ssub.s32 %s22, %s29
      %p31 = scmp.eq.s32.totalorder %s30, 0
      %s33 = sadd.s32 %s32, 1
      %s34 = scalar_select %p31, %s32, %s33
      %p37 = pneg %p31
      %p38 = scmp.eq.s32.totalorder %s22, 1
      %p39 = por %p37, %p38
      %p40 = scmp.ne.s32.totalorder %s32, %s35
      %p41 = scmp.eq.s32.totalorder %s22, 0
      %p42 = por %p40, %p41
      %p43 = scmp.ne.s32.totalorder %s32, %s35
      %p44 = scmp.eq.s32.totalorder %s27, 1
      %p45 = por %p43, %p44
      %p46 = scmp.ne.s32.totalorder %s35, %s36
      %p47 = scmp.eq.s32.totalorder %s27, 0
      %p48 = por %p46, %p47
      %p49 = scmp.ne.s32.totalorder %s35, %s36
      %p50 = scmp.eq.s32.totalorder %s28, 1
      %p51 = por %p49, %p50
      %p53 = scmp.ne.s32.totalorder %s36, %s52
      %p54 = scmp.eq.s32.totalorder %s28, 0
      %p55 = por %p53, %p54
      %s57 = sadd.s32 %s56, 1
      %p60 = scmp.eq.s32.totalorder %s22, 1
      %p61 = scmp.ne.s32.totalorder %s56, %s58
      %p62 = scmp.eq.s32.totalorder %s22, 0
      %p63 = por %p61, %p62
      %p64 = scmp.ne.s32.totalorder %s56, %s58
      %p65 = scmp.eq.s32.totalorder %s27, 1
      %p66 = por %p64, %p65
      %p67 = scmp.ne.s32.totalorder %s58, %s59
      %p68 = scmp.eq.s32.totalorder %s27, 0
      %p69 = por %p67, %p68
      %p70 = scmp.ne.s32.totalorder %s58, %s59
      %p71 = scmp.eq.s32.totalorder %s28, 1
      %p72 = por %p70, %p71
      %p74 = scmp.ne.s32.totalorder %s59, %s73
      %p75 = scmp.eq.s32.totalorder %s28, 0
      %p76 = por %p74, %p75
      %s78 = sadd.s32 %s77, 1
      %p81 = scmp.eq.s32.totalorder %s22, 1
      %p82 = scmp.ne.s32.totalorder %s77, %s79
      %p83 = scmp.eq.s32.totalorder %s22, 0
      %p84 = por %p82, %p83
      %p85 = scmp.ne.s32.totalorder %s77, %s79
      %p86 = scmp.eq.s32.totalorder %s27, 1
      %p87 = por %p85, %p86
      %p88 = scmp.ne.s32.totalorder %s79, %s80
      %p89 = scmp.eq.s32.totalorder %s27, 0
      %p90 = por %p88, %p89
      %p91 = scmp.ne.s32.totalorder %s79, %s80
      %p92 = scmp.eq.s32.totalorder %s28, 1
      %p93 = por %p91, %p92
      %p95 = scmp.ne.s32.totalorder %s80, %s94
      %p96 = scmp.eq.s32.totalorder %s28, 0
      %p97 = por %p95, %p96
      %s99 = sadd.s32 %s98, 1
      %p102 = scmp.eq.s32.totalorder %s22, 1
      %p103 = scmp.ne.s32.totalorder %s98, %s100
      %p104 = scmp.eq.s32.totalorder %s22, 0
      %p105 = por %p103, %p104
      %p106 = scmp.ne.s32.totalorder %s98, %s100
      %p107 = scmp.eq.s32.totalorder %s27, 1
      %p108 = por %p106, %p107
      %p109 = scmp.ne.s32.totalorder %s100, %s101
      %p110 = scmp.eq.s32.totalorder %s27, 0
      %p111 = por %p109, %p110
      %p112 = scmp.ne.s32.totalorder %s100, %s101
      %p113 = scmp.eq.s32.totalorder %s28, 1
      %p114 = por %p112, %p113
      %p116 = scmp.ne.s32.totalorder %s101, %s115
      %p117 = scmp.eq.s32.totalorder %s28, 0
      %p118 = por %p116, %p117
      %s120 = sadd.s32 %s119, 1
      %p123 = scmp.eq.s32.totalorder %s22, 1
      %p124 = scmp.ne.s32.totalorder %s119, %s121
      %p125 = scmp.eq.s32.totalorder %s22, 0
      %p126 = por %p124, %p125
      %p127 = scmp.ne.s32.totalorder %s119, %s121
      %p128 = scmp.eq.s32.totalorder %s27, 1
      %p129 = por %p127, %p128
      %p130 = scmp.ne.s32.totalorder %s121, %s122
      %p131 = scmp.eq.s32.totalorder %s27, 0
      %p132 = por %p130, %p131
      %p133 = scmp.ne.s32.totalorder %s121, %s122
      %p134 = scmp.eq.s32.totalorder %s28, 1
      %p135 = por %p133, %p134
      %p137 = scmp.ne.s32.totalorder %s122, %s136
      %p138 = scmp.eq.s32.totalorder %s28, 0
      %p139 = por %p137, %p138
      %s141 = sadd.s32 %s140, 1
      %p144 = scmp.eq.s32.totalorder %s22, 1
      %p145 = scmp.ne.s32.totalorder %s140, %s142
      %p146 = scmp.eq.s32.totalorder %s22, 0
      %p147 = por %p145, %p146
      %p148 = scmp.ne.s32.totalorder %s140, %s142
      %p149 = scmp.eq.s32.totalorder %s27, 1
      %p150 = por %p148, %p149
      %p151 = scmp.ne.s32.totalorder %s142, %s143
      %p152 = scmp.eq.s32.totalorder %s27, 0
      %p153 = por %p151, %p152
      %p154 = scmp.ne.s32.totalorder %s142, %s143
      %p155 = scmp.eq.s32.totalorder %s28, 1
      %p156 = por %p154, %p155
      %p158 = scmp.ne.s32.totalorder %s143, %s157
      %p159 = scmp.eq.s32.totalorder %s28, 0
      %p160 = por %p158, %p159
      %s162 = sadd.s32 %s161, 1
      %p165 = scmp.eq.s32.totalorder %s22, 1
      %p166 = scmp.ne.s32.totalorder %s161, %s163
      %p167 = scmp.eq.s32.totalorder %s22, 0
      %p168 = por %p166, %p167
      %p169 = scmp.ne.s32.totalorder %s161, %s163
      %p170 = scmp.eq.s32.totalorder %s27, 1
      %p171 = por %p169, %p170
      %p172 = scmp.ne.s32.totalorder %s163, %s164
      %p173 = scmp.eq.s32.totalorder %s27, 0
      %p174 = por %p172, %p173
      %p175 = scmp.ne.s32.totalorder %s163, %s164
      %p176 = scmp.eq.s32.totalorder %s28, 1
      %p177 = por %p175, %p176
      %p179 = scmp.ne.s32.totalorder %s164, %s178
      %p180 = scmp.eq.s32.totalorder %s28, 0
      %p181 = por %p179, %p180
      %s183 = sadd.s32 %s182, 1
      %p186 = scmp.eq.s32.totalorder %s22, 1
      %p187 = scmp.ne.s32.totalorder %s182, %s184
      %p188 = scmp.eq.s32.totalorder %s22, 0
      %p189 = por %p187, %p188
      %p190 = scmp.ne.s32.totalorder %s182, %s184
      %p191 = scmp.eq.s32.totalorder %s27, 1
      %p192 = por %p190, %p191
      %p193 = scmp.ne.s32.totalorder %s184, %s185
      %p194 = scmp.eq.s32.totalorder %s27, 0
      %p195 = por %p193, %p194
      %p196 = scmp.ne.s32.totalorder %s184, %s185
      %p197 = scmp.eq.s32.totalorder %s28, 1
      %p198 = por %p196, %p197
      %p200 = scmp.ne.s32.totalorder %s185, %s199
      %p201 = scmp.eq.s32.totalorder %s28, 0
      %p202 = por %p200, %p201
      %s204 = sadd.s32 %s203, 1
      %p207 = scmp.eq.s32.totalorder %s22, 1
      %p208 = scmp.ne.s32.totalorder %s203, %s205
      %p209 = scmp.eq.s32.totalorder %s22, 0
      %p210 = por %p208, %p209
      %p211 = scmp.ne.s32.totalorder %s203, %s205
      %p212 = scmp.eq.s32.totalorder %s27, 1
      %p213 = por %p211, %p212
      %p214 = scmp.ne.s32.totalorder %s205, %s206
      %p215 = scmp.eq.s32.totalorder %s27, 0
      %p216 = por %p214, %p215
      %p217 = scmp.ne.s32.totalorder %s205, %s206
      %p218 = scmp.eq.s32.totalorder %s28, 1
      %p219 = por %p217, %p218
      %p221 = scmp.ne.s32.totalorder %s206, %s220
      %p222 = scmp.eq.s32.totalorder %s28, 0
      %p223 = por %p221, %p222
      %s225 = sadd.s32 %s224, 1
      %p228 = scmp.eq.s32.totalorder %s22, 1
      %p229 = scmp.ne.s32.totalorder %s224, %s226
      %p230 = scmp.eq.s32.totalorder %s22, 0
      %p231 = por %p229, %p230
      %p232 = scmp.ne.s32.totalorder %s224, %s226
      %p233 = scmp.eq.s32.totalorder %s27, 1
      %p234 = por %p232, %p233
      %p235 = scmp.ne.s32.totalorder %s226, %s227
      %p236 = scmp.eq.s32.totalorder %s27, 0
      %p237 = por %p235, %p236
      %p238 = scmp.ne.s32.totalorder %s226, %s227
      %p239 = scmp.eq.s32.totalorder %s28, 1
      %p240 = por %p238, %p239
      %p242 = scmp.ne.s32.totalorder %s227, %s241
      %p243 = scmp.eq.s32.totalorder %s28, 0
      %p244 = por %p242, %p243
      %s246 = sadd.s32 %s245, 1
      %p249 = scmp.eq.s32.totalorder %s22, 1
      %p250 = scmp.ne.s32.totalorder %s245, %s247
      %p251 = scmp.eq.s32.totalorder %s22, 0
      %p252 = por %p250, %p251
      %p253 = scmp.ne.s32.totalorder %s245, %s247
      %p254 = scmp.eq.s32.totalorder %s27, 1
      %p255 = por %p253, %p254
      %p256 = scmp.ne.s32.totalorder %s247, %s248
      %p257 = scmp.eq.s32.totalorder %s27, 0
      %p258 = por %p256, %p257
      %p259 = scmp.ne.s32.totalorder %s247, %s248
      %p260 = scmp.eq.s32.totalorder %s28, 1
      %p261 = por %p259, %p260
      %p263 = scmp.ne.s32.totalorder %s248, %s262
      %p264 = scmp.eq.s32.totalorder %s28, 0
      %p265 = por %p263, %p264
      %s267 = sadd.s32 %s266, 1
      %p270 = scmp.eq.s32.totalorder %s22, 1
      %p271 = scmp.ne.s32.totalorder %s266, %s268
      %p272 = scmp.eq.s32.totalorder %s22, 0
      %p273 = por %p271, %p272
      %p274 = scmp.ne.s32.totalorder %s266, %s268
      %p275 = scmp.eq.s32.totalorder %s27, 1
      %p276 = por %p274, %p275
      %p277 = scmp.ne.s32.totalorder %s268, %s269
      %p278 = scmp.eq.s32.totalorder %s27, 0
      %p279 = por %p277, %p278
      %p280 = scmp.ne.s32.totalorder %s268, %s269
      %p281 = scmp.eq.s32.totalorder %s28, 1
      %p282 = por %p280, %p281
      %p284 = scmp.ne.s32.totalorder %s269, %s283
      %p285 = scmp.eq.s32.totalorder %s28, 0
      %p286 = por %p284, %p285
      %s288 = sadd.s32 %s287, 1
      %p291 = scmp.eq.s32.totalorder %s22, 1
      %p292 = scmp.ne.s32.totalorder %s287, %s289
      %p293 = scmp.eq.s32.totalorder %s22, 0
      %p294 = por %p292, %p293
      %p295 = scmp.ne.s32.totalorder %s287, %s289
      %p296 = scmp.eq.s32.totalorder %s27, 1
      %p297 = por %p295, %p296
      %p298 = scmp.ne.s32.totalorder %s289, %s290
      %p299 = scmp.eq.s32.totalorder %s27, 0
      %p300 = por %p298, %p299
      %p301 = scmp.ne.s32.totalorder %s289, %s290
      %p302 = scmp.eq.s32.totalorder %s28, 1
      %p303 = por %p301, %p302
      %p305 = scmp.ne.s32.totalorder %s290, %s304
      %p306 = scmp.eq.s32.totalorder %s28, 0
      %p307 = por %p305, %p306
      %s308 = ssub.s32 %s22, %s29
      %p309 = scmp.eq.s32.totalorder %s308, 0
      %s311 = sadd.s32 %s310, 1
      %s312 = scalar_select %p309, %s310, %s311
      %p315 = pneg %p309
      %p316 = scmp.eq.s32.totalorder %s22, 1
      %p317 = por %p315, %p316
      %p318 = scmp.ne.s32.totalorder %s310, %s313
      %p319 = scmp.eq.s32.totalorder %s22, 0
      %p320 = por %p318, %p319
      %p321 = scmp.ne.s32.totalorder %s310, %s313
      %p322 = scmp.eq.s32.totalorder %s27, 1
      %p323 = por %p321, %p322
      %p324 = scmp.ne.s32.totalorder %s313, %s314
      %p325 = scmp.eq.s32.totalorder %s27, 0
      %p326 = por %p324, %p325
      %p327 = scmp.ne.s32.totalorder %s313, %s314
      %p328 = scmp.eq.s32.totalorder %s28, 1
      %p329 = por %p327, %p328
      %p331 = scmp.ne.s32.totalorder %s314, %s330
      %p332 = scmp.eq.s32.totalorder %s28, 0
      %p333 = por %p331, %p332
      %p334 = scmp.le.s32.totalorder 1, %s22
      %p335 = scmp.lt.s32.totalorder %s22, 3
      %p336 = pnand %p334, %p335
      %p337 = pneg %p336
      // Predicated region
      $region9: #{tpu_custom_call.1} parent=5 // pred_check
        _
      $region10: #{tpu_custom_call.1} parent=5 // pred_check_branch
        %339 = sbr.rel (%p336) target = $region12
      $region11: #{tpu_custom_call.1} parent=5 // pred_region
        %s340 = ssub.s32 %s22, 1
        // Predicated region
        $region13: #{tpu_custom_call.1} parent=11 // pred_check
          %p341 = pneg %p69
        $region14: #{tpu_custom_call.1} parent=11 // pred_check_branch
          %343 = sbr.rel (%p341) target = $region16
        $region15: #{tpu_custom_call.1} parent=11 // pred_region
          _
        $region16: #{tpu_custom_call.1} parent=11 // pred_fallthru
          _
        // Predicated region
        $region17: #{tpu_custom_call.1} parent=11 // pred_check
          %p344 = pneg %p90
        $region18: #{tpu_custom_call.1} parent=11 // pred_check_branch
          %346 = sbr.rel (%p344) target = $region20
        $region19: #{tpu_custom_call.1} parent=11 // pred_region
          _
        $region20: #{tpu_custom_call.1} parent=11 // pred_fallthru
          _
        // Predicated region
        $region21: #{tpu_custom_call.1} parent=11 // pred_check
          %p347 = pneg %p111
        $region22: #{tpu_custom_call.1} parent=11 // pred_check_branch
          %349 = sbr.rel (%p347) target = $region24
        $region23: #{tpu_custom_call.1} parent=11 // pred_region
          _
        $region24: #{tpu_custom_call.1} parent=11 // pred_fallthru
          _
        // Predicated region
        $region25: #{tpu_custom_call.1} parent=11 // pred_check
          %p350 = pneg %p132
        $region26: #{tpu_custom_call.1} parent=11 // pred_check_branch
          %352 = sbr.rel (%p350) target = $region28
        $region27: #{tpu_custom_call.1} parent=11 // pred_region
          _
        $region28: #{tpu_custom_call.1} parent=11 // pred_fallthru
          _
        // Predicated region
        $region29: #{tpu_custom_call.1} parent=11 // pred_check
          %p353 = pneg %p153
        $region30: #{tpu_custom_call.1} parent=11 // pred_check_branch
          %355 = sbr.rel (%p353) target = $region32
        $region31: #{tpu_custom_call.1} parent=11 // pred_region
          _
        $region32: #{tpu_custom_call.1} parent=11 // pred_fallthru
          _
        // Predicated region
        $region33: #{tpu_custom_call.1} parent=11 // pred_check
          %p356 = pneg %p174
        $region34: #{tpu_custom_call.1} parent=11 // pred_check_branch
          %358 = sbr.rel (%p356) target = $region36
        $region35: #{tpu_custom_call.1} parent=11 // pred_region
          _
        $region36: #{tpu_custom_call.1} parent=11 // pred_fallthru
          _
        // Predicated region
        $region37: #{tpu_custom_call.1} parent=11 // pred_check
          %p359 = pneg %p195
        $region38: #{tpu_custom_call.1} parent=11 // pred_check_branch
          %361 = sbr.rel (%p359) target = $region40
        $region39: #{tpu_custom_call.1} parent=11 // pred_region
          _
        $region40: #{tpu_custom_call.1} parent=11 // pred_fallthru
          _
        // Predicated region
        $region41: #{tpu_custom_call.1} parent=11 // pred_check
          %p362 = pneg %p216
        $region42: #{tpu_custom_call.1} parent=11 // pred_check_branch
          %364 = sbr.rel (%p362) target = $region44
        $region43: #{tpu_custom_call.1} parent=11 // pred_region
          _
        $region44: #{tpu_custom_call.1} parent=11 // pred_fallthru
          _
        // Predicated region
        $region45: #{tpu_custom_call.1} parent=11 // pred_check
          %p365 = pneg %p237
        $region46: #{tpu_custom_call.1} parent=11 // pred_check_branch
          %367 = sbr.rel (%p365) target = $region48
        $region47: #{tpu_custom_call.1} parent=11 // pred_region
          _
        $region48: #{tpu_custom_call.1} parent=11 // pred_fallthru
          _
        // Predicated region
        $region49: #{tpu_custom_call.1} parent=11 // pred_check
          %p368 = pneg %p258
        $region50: #{tpu_custom_call.1} parent=11 // pred_check_branch
          %370 = sbr.rel (%p368) target = $region52
        $region51: #{tpu_custom_call.1} parent=11 // pred_region
          _
        $region52: #{tpu_custom_call.1} parent=11 // pred_fallthru
          _
        // Predicated region
        $region53: #{tpu_custom_call.1} parent=11 // pred_check
          %p371 = pneg %p279
        $region54: #{tpu_custom_call.1} parent=11 // pred_check_branch
          %373 = sbr.rel (%p371) target = $region56
        $region55: #{tpu_custom_call.1} parent=11 // pred_region
          _
        $region56: #{tpu_custom_call.1} parent=11 // pred_fallthru
          _
        // Predicated region
        $region57: #{tpu_custom_call.1} parent=11 // pred_check
          %p374 = pneg %p300
        $region58: #{tpu_custom_call.1} parent=11 // pred_check_branch
          %376 = sbr.rel (%p374) target = $region60
        $region59: #{tpu_custom_call.1} parent=11 // pred_region
          _
        $region60: #{tpu_custom_call.1} parent=11 // pred_fallthru
          _
      $region12: #{tpu_custom_call.1} parent=5 // pred_fallthru
        _
      %p377 = scmp.lt.s32.totalorder %s22, 2
      // Predicated region
      $region61: #{tpu_custom_call.1} parent=5 // pred_check
        %p378 = pneg %p377
      $region62: #{tpu_custom_call.1} parent=5 // pred_check_branch
        %380 = sbr.rel (%p378) target = $region64
      $region63: #{tpu_custom_call.1} parent=5 // pred_region
        // Predicated region
        $region65: #{tpu_custom_call.1} parent=63 // pred_check
          %p381 = pneg %p42
        $region66: #{tpu_custom_call.1} parent=63 // pred_check_branch
          %383 = sbr.rel (%p381) target = $region68
        $region67: #{tpu_custom_call.1} parent=63 // pred_region
          %p384 = scmp.lt.s32.totalorder %s22, 1
          %s385 = scalar_select %p384, %s22, 1
          %s386 = smul.addr %s385, 2
          %s387 = smul.addr %s386, 8
          %s388 = scalar_lea.vmem %s0, %s387
        $region68: #{tpu_custom_call.1} parent=63 // pred_fallthru
          _
      $region64: #{tpu_custom_call.1} parent=5 // pred_fallthru
        _
      %p389 = scmp.le.s32.totalorder 1, %s22
      %p390 = scmp.lt.s32.totalorder %s22, 3
      %p391 = pnand %p389, %p390
      %p392 = pneg %p391
      // Predicated region
      $region69: #{tpu_custom_call.1} parent=5 // pred_check
        _
      $region70: #{tpu_custom_call.1} parent=5 // pred_check_branch
        %394 = sbr.rel (%p391) target = $region72
      $region71: #{tpu_custom_call.1} parent=5 // pred_region
        %s395 = ssub.s32 %s22, 1
        %p396 = scmp.lt.s32.totalorder %s27, 1
        %s397 = scalar_select %p396, %s27, 1
        %s398 = smul.addr %s397, 2
        %s399 = smul.addr %s398, 8
        %s400 = scalar_lea.vmem %s0, %s399
        %p401 = pneg %p48
        %p402 = pneg %p45
        %p403 = pneg %p69
        %p404 = pneg %p66
        %p405 = pneg %p90
        %p406 = pneg %p87
        %p407 = pneg %p111
        %p408 = pneg %p108
        %p409 = pneg %p132
        %p410 = pneg %p129
        %p411 = pneg %p153
        %p412 = pneg %p150
        %p413 = pneg %p174
        %p414 = pneg %p171
        %p415 = pneg %p195
        %p416 = pneg %p192
        %p417 = pneg %p216
        %p418 = pneg %p213
        %p419 = pneg %p237
        %p420 = pneg %p234
        %p421 = pneg %p258
        %p422 = pneg %p255
        %p423 = pneg %p279
        %p424 = pneg %p276
        %p425 = pneg %p300
        %p426 = pneg %p297
        %p427 = pneg %p326
        %p428 = pneg %p323
        %s429 = sand.u32 %s313, 1
        %s430 = scalar_lea.sflag [#allocation3], %s429
        %s431 = sand.u32 %s313, 1
        %s432 = smul.addr %s431, 16
        %s433 = scalar_lea.vmem [#allocation2], %s432
        %p434 = scmp.lt.s32.totalorder %s27, 1
        %s435 = scalar_select %p434, %s27, 1
        %s436 = smul.addr %s435, 2
        %s437 = smul.addr %s436, 8
        %s438 = scalar_lea.vmem %s0, %s437
        %v439 = vld [vmem:[%s12] sm:$0xff]
        %v440 = vld [vmem:[%s12 + $0x8] sm:$0xff]
        %v441 = vld [vmem:[%s12 + $0x10] sm:$0xff]
        %v442 = vld [vmem:[%s12 + $0x18] sm:$0xff]
        %v443 = vld [vmem:[%s12 + $0x20] sm:$0xff]
        %v444 = vld [vmem:[%s12 + $0x28] sm:$0xff]
        %v445 = vld [vmem:[%s12 + $0x30] sm:$0xff]
        %v446 = vld [vmem:[%s12 + $0x38] sm:$0xff]
        %v447 = vld [vmem:[%s12 + $0x40] sm:$0xff]
        %v448 = vld [vmem:[%s12 + $0x48] sm:$0xff]
        %v449 = vld [vmem:[%s12 + $0x50] sm:$0xff]
        %v450 = vld [vmem:[%s12 + $0x58] sm:$0xff]
        %v451 = vld [vmem:[%s12 + $0x60] sm:$0xff]
        %v452 = vld [vmem:[%s12 + $0x68] sm:$0xff]
        %v453 = vld [vmem:[%s12 + $0x70] sm:$0xff]
        %v454 = vld [vmem:[%s12 + $0x78] sm:$0xff]
        %v455 = vld [vmem:[%s12 + $0x80] sm:$0xff]
        %v456 = vld [vmem:[%s12 + $0x88] sm:$0xff]
        %v457 = vld [vmem:[%s12 + $0x90] sm:$0xff]
        %v458 = vld [vmem:[%s12 + $0x98] sm:$0xff]
        %v459 = vld [vmem:[%s12 + $0xa0] sm:$0xff]
        %v460 = vld [vmem:[%s12 + $0xa8] sm:$0xff]
        %v461 = vld [vmem:[%s12 + $0xb0] sm:$0xff]
        %v462 = vld [vmem:[%s12 + $0xb8] sm:$0xff]
        %v463 = vld [vmem:[%s12 + $0xc0] sm:$0xff]
        %v464 = vld [vmem:[%s12 + $0xc8] sm:$0xff]
        %v465 = vld [vmem:[%s12 + $0xd0] sm:$0xff]
        %v466 = vld [vmem:[%s12 + $0xd8] sm:$0xff]
        %v467 = vld [vmem:[%s12 + $0xe0] sm:$0xff]
        %v468 = vld [vmem:[%s12 + $0xe8] sm:$0xff]
        %v469 = vld [vmem:[%s12 + $0xf0] sm:$0xff]
        %v470 = vld [vmem:[%s12 + $0xf8] sm:$0xff]
        %v471 = vld [vmem:[%s438] sm:$0xff]
        %v472 = vld [vmem:[%s438 + $0x8] sm:$0xff]
        %473 = vmatpush.msra.mxu0 %v454
        %474 = vmatpush.msra.mxu0 %v453
        %475 = vmatpush.msra.mxu0 %v452
        %476 = vmatpush.msra.mxu0 %v451
        %477 = vmatpush.msra.mxu0 %v450
        %478 = vmatpush.msra.mxu0 %v449
        %479 = vmatpush.msra.mxu0 %v448
        %480 = vmatpush.msra.mxu0 %v447
        %481 = vmatpush.msra.mxu0 %v446
        %482 = vmatpush.msra.mxu0 %v445
        %483 = vmatpush.msra.mxu0 %v444
        %484 = vmatpush.msra.mxu0 %v443
        %485 = vmatpush.msra.mxu0 %v442
        %486 = vmatpush.msra.mxu0 %v441
        %487 = vmatpush.msra.mxu0 %v440
        %488 = vmatpush.msra.mxu0 %v439
        %489 = vmatmul.f32.gmra.mxu0 %v471
        %v490 = vpop.f32.mrf.mxu0
        %v491 = vadd.f32 0.0, %v490
        %492 = vdwg.mxu0
        %493 = vmatpush.msra.mxu0 %v470
        %494 = vmatpush.msra.mxu0 %v469
        %495 = vmatpush.msra.mxu0 %v468
        %496 = vmatpush.msra.mxu0 %v467
        %497 = vmatpush.msra.mxu0 %v466
        %498 = vmatpush.msra.mxu0 %v465
        %499 = vmatpush.msra.mxu0 %v464
        %500 = vmatpush.msra.mxu0 %v463
        %501 = vmatpush.msra.mxu0 %v462
        %502 = vmatpush.msra.mxu0 %v461
        %503 = vmatpush.msra.mxu0 %v460
        %504 = vmatpush.msra.mxu0 %v459
        %505 = vmatpush.msra.mxu0 %v458
        %506 = vmatpush.msra.mxu0 %v457
        %507 = vmatpush.msra.mxu0 %v456
        %508 = vmatpush.msra.mxu0 %v455
        %509 = vmatmul.f32.gmra.mxu0 %v472
        %v510 = vpop.f32.mrf.mxu0
        %v511 = vadd.f32 %v491, %v510
        %512 = vdwg.mxu0
        %v513 = vld [vmem:[%s5] sm:$0xff]
        %v514 = vld [vmem:[%s5 + $0x8] sm:$0xff]
        %v515 = vadd.f32 %v471, %v472
        %516 = vadd.xlane.f32.xlu0 %v515
        %v517 = vpop.xlane.xlu0 %516
        %v518 = vmul.f32 %v517, 0.00390625
        %v519 = vmul.f32 %v471, %v471
        %v520 = vmul.f32 %v472, %v472
        %v521 = vadd.f32 %v519, %v520
        %522 = vadd.xlane.f32.xlu0 %v521
        %v523 = vpop.xlane.xlu0 %522
        %v524 = vmul.f32 %v523, 0.00390625
        %v525 = vmul.f32 %v518, %v518
        %v526 = vsub.f32 %v524, %v525
        %v527 = vsub.f32 %v471, %v518
        %v528 = vsub.f32 %v472, %v518
        %v529 = vadd.f32 %v526, 1e-05
        %v530 = vrsqrt.pop %v529
        %v531 = vmul.f32 %v530, %v529
        %v532 = vmul.f32 %v531, %v530
        %v533 = vmul.f32 0.5, %v532
        %v534 = vsub.f32 1.5, %v533
        %v535 = vmul.f32 %v530, %v534
        %vm536 = vweird.f32 %v529
        %vm537 = vweird.f32 %v530
        %vm538 = vmor %vm536, %vm537
        %v539 = vsel %vm538, %v530, %v535
        %v540 = vmul.f32 %v527, %v539
        %v541 = vmul.f32 %v528, %v539
        %v542 = vld [vmem:[%s6] sm:$0xff]
        %544 = vset.pattern.permute.xlu0 0
        %545 = vperm.xlu0 %544, %v542
        %v546 = vpop.permute.xlu0 %545
        %v548 = vmul.f32 %v540, %v546
        %v549 = vmul.f32 %v541, %v546
        %v550 = vld [vmem:[%s7] sm:$0xff]
        %552 = vset.pattern.permute.xlu0 0
        %553 = vperm.xlu0 %552, %v550
        %v554 = vpop.permute.xlu0 %553
        %v556 = vadd.f32 %v548, %v554
        %v557 = vadd.f32 %v549, %v554
        %v558 = vmul.f32 %v556, 0.2
        %v559 = vmul.f32 %v557, 0.2
        %v560 = vmax.f32 %v556, %v558
        %v561 = vmax.f32 %v557, %v559
        %562 = vrot.lane.b32.xlu0 %v560, 17
        %v563 = vpop.permute.xlu0 %562
        %564 = vrot.lane.b32.xlu0 %v561, 17
        %v565 = vpop.permute.xlu0 %564
        %v566 = vlaneseq
        %v567 = vand.u32 %v566, 127
        %vm568 = vcmp.lt.s32.totalorder %v567, 17
        %v569 = vsel %vm568, %v563, %v565
        %v570 = vsel %vm568, %v565, %v563
        %v571 = vld [vmem:[%s10] ss:$8 sm:$0x3]
        %v573 = vperm.slane %v571, 0
        %v574 = vperm.slane %v571, 1
        %v577 = vmul.f32 %v570, %v573
        %v578 = vmul.f32 %v569, %v574
        %579 = vrot.lane.b32.xlu0 %v560, 16
        %v580 = vpop.permute.xlu0 %579
        %581 = vrot.lane.b32.xlu0 %v561, 16
        %v582 = vpop.permute.xlu0 %581
        %vm583 = vcmp.lt.s32.totalorder %v567, 16
        %v584 = vsel %vm583, %v580, %v582
        %v585 = vsel %vm583, %v582, %v580
        %s586 = scalar_lea.vmem %s10, 1
        %v587 = vld [vmem:[%s586] ss:$8 sm:$0x3]
        %v589 = vperm.slane %v587, 0
        %v590 = vperm.slane %v587, 1
        %v593 = vmul.f32 %v585, %v589
        %v594 = vmul.f32 %v584, %v590
        %595 = vrot.lane.b32.xlu0 %v560, 15
        %v596 = vpop.permute.xlu0 %595
        %597 = vrot.lane.b32.xlu0 %v561, 15
        %v598 = vpop.permute.xlu0 %597
        %vm599 = vcmp.lt.s32.totalorder %v567, 15
        %v600 = vsel %vm599, %v596, %v598
        %v601 = vsel %vm599, %v598, %v596
        %s602 = scalar_lea.vmem %s10, 2
        %v603 = vld [vmem:[%s602] ss:$8 sm:$0x3]
        %v605 = vperm.slane %v603, 0
        %v606 = vperm.slane %v603, 1
        %v609 = vmul.f32 %v601, %v605
        %v610 = vmul.f32 %v600, %v606
        %611 = vrot.lane.b32.xlu0 %v560, 1
        %v612 = vpop.permute.xlu0 %611
        %613 = vrot.lane.b32.xlu0 %v561, 1
        %v614 = vpop.permute.xlu0 %613
        %vm615 = vcmp.lt.s32.totalorder %v567, 1
        %v616 = vsel %vm615, %v612, %v614
        %v617 = vsel %vm615, %v614, %v612
        %s618 = scalar_lea.vmem %s10, 3
        %v619 = vld [vmem:[%s618] ss:$8 sm:$0x3]
        %v621 = vperm.slane %v619, 0
        %v622 = vperm.slane %v619, 1
        %v625 = vmul.f32 %v617, %v621
        %v626 = vmul.f32 %v616, %v622
        %627 = vrot.lane.b32.xlu0 %v560, 127
        %v628 = vpop.permute.xlu0 %627
        %629 = vrot.lane.b32.xlu0 %v561, 127
        %v630 = vpop.permute.xlu0 %629
        %vm631 = vcmp.lt.s32.totalorder %v567, 127
        %v632 = vsel %vm631, %v628, %v630
        %v633 = vsel %vm631, %v630, %v628
        %s634 = scalar_lea.vmem %s10, 5
        %v635 = vld [vmem:[%s634] ss:$8 sm:$0x3]
        %v637 = vperm.slane %v635, 0
        %v638 = vperm.slane %v635, 1
        %v641 = vmul.f32 %v632, %v637
        %v642 = vmul.f32 %v633, %v638
        %643 = vrot.lane.b32.xlu0 %v560, 113
        %v644 = vpop.permute.xlu0 %643
        %645 = vrot.lane.b32.xlu0 %v561, 113
        %v646 = vpop.permute.xlu0 %645
        %vm647 = vcmp.lt.s32.totalorder %v567, 113
        %v648 = vsel %vm647, %v644, %v646
        %v649 = vsel %vm647, %v646, %v644
        %s650 = scalar_lea.vmem %s10, 6
        %v651 = vld [vmem:[%s650] ss:$8 sm:$0x3]
        %v653 = vperm.slane %v651, 0
        %v654 = vperm.slane %v651, 1
        %v657 = vmul.f32 %v648, %v653
        %v658 = vmul.f32 %v649, %v654
        %659 = vrot.lane.b32.xlu0 %v560, 112
        %v660 = vpop.permute.xlu0 %659
        %661 = vrot.lane.b32.xlu0 %v561, 112
        %v662 = vpop.permute.xlu0 %661
        %vm663 = vcmp.lt.s32.totalorder %v567, 112
        %v664 = vsel %vm663, %v660, %v662
        %v665 = vsel %vm663, %v662, %v660
        %s666 = scalar_lea.vmem %s10, 7
        %v667 = vld [vmem:[%s666] ss:$8 sm:$0x3]
        %v669 = vperm.slane %v667, 0
        %v670 = vperm.slane %v667, 1
        %v673 = vmul.f32 %v664, %v669
        %v674 = vmul.f32 %v665, %v670
        %675 = vrot.lane.b32.xlu0 %v560, 111
        %v676 = vpop.permute.xlu0 %675
        %677 = vrot.lane.b32.xlu0 %v561, 111
        %v678 = vpop.permute.xlu0 %677
        %vm679 = vcmp.lt.s32.totalorder %v567, 111
        %v680 = vsel %vm679, %v676, %v678
        %v681 = vsel %vm679, %v678, %v676
        %s682 = scalar_lea.vmem %s10, 16
        %v683 = vld [vmem:[%s682] ss:$8 sm:$0x3]
        %v685 = vperm.slane %v683, 0
        %v686 = vperm.slane %v683, 1
        %v689 = vmul.f32 %v680, %v685
        %v690 = vmul.f32 %v681, %v686
        %v691 = vld [vmem:[%s1] sm:$0xff]
        %v692 = vld [vmem:[%s2] sm:$0xff]
        %694 = vset.pattern.permute.xlu0 0
        %695 = vperm.xlu0 %694, %v692
        %v696 = vpop.permute.xlu0 %695
        %vm698 = vcmask 588800
        %v700 = vsel %vm698, %v691, 0
        %702 = vmatpush.msra.mxu0 0.0
        %703 = vmatpush.msra.mxu0 0.0
        %704 = vmatpush.msra.mxu0 0.0
        %705 = vmatpush.msra.mxu0 0.0
        %706 = vmatpush.msra.mxu0 0.0
        %707 = vmatpush.msra.mxu0 0.0
        %708 = vmatpush.msra.mxu0 0.0
        %709 = vmatpush.msra.mxu0 %v689
        %710 = vmatpush.msra.mxu0 %v673
        %711 = vmatpush.msra.mxu0 %v657
        %712 = vmatpush.msra.mxu0 %v641
        %713 = vmatpush.msra.mxu0 %v560
        %714 = vmatpush.msra.mxu0 %v625
        %715 = vmatpush.msra.mxu0 %v609
        %716 = vmatpush.msra.mxu0 %v593
        %717 = vmatpush.msra.mxu0 %v577
        %718 = vmatmul.f32.gmra.mxu0 %v700
        %v719 = vpop.f32.mrf.mxu0
        %v720 = vadd.f32 %v696, %v719
        %721 = vdwg.mxu0
        %722 = vmatpush.msra.mxu0 0.0
        %723 = vmatpush.msra.mxu0 0.0
        %724 = vmatpush.msra.mxu0 0.0
        %725 = vmatpush.msra.mxu0 0.0
        %726 = vmatpush.msra.mxu0 0.0
        %727 = vmatpush.msra.mxu0 0.0
        %728 = vmatpush.msra.mxu0 0.0
        %729 = vmatpush.msra.mxu0 %v690
        %730 = vmatpush.msra.mxu0 %v674
        %731 = vmatpush.msra.mxu0 %v658
        %732 = vmatpush.msra.mxu0 %v642
        %733 = vmatpush.msra.mxu0 %v561
        %734 = vmatpush.msra.mxu0 %v626
        %735 = vmatpush.msra.mxu0 %v610
        %736 = vmatpush.msra.mxu0 %v594
        %737 = vmatpush.msra.mxu0 %v578
        %738 = vmatmul.f32.gmra.mxu0 %v700
        %v739 = vpop.f32.mrf.mxu0
        %v740 = vadd.f32 %v696, %v739
        %741 = vdwg.mxu0
        %742 = vmatpush.msra.mxu0 %v454
        %743 = vmatpush.msra.mxu0 %v453
        %744 = vmatpush.msra.mxu0 %v452
        %745 = vmatpush.msra.mxu0 %v451
        %746 = vmatpush.msra.mxu0 %v450
        %747 = vmatpush.msra.mxu0 %v449
        %748 = vmatpush.msra.mxu0 %v448
        %749 = vmatpush.msra.mxu0 %v447
        %750 = vmatpush.msra.mxu0 %v446
        %751 = vmatpush.msra.mxu0 %v445
        %752 = vmatpush.msra.mxu0 %v444
        %753 = vmatpush.msra.mxu0 %v443
        %754 = vmatpush.msra.mxu0 %v442
        %755 = vmatpush.msra.mxu0 %v441
        %756 = vmatpush.msra.mxu0 %v440
        %757 = vmatpush.msra.mxu0 %v439
        %758 = vmatmul.f32.gmra.mxu0 %v720
        %v759 = vpop.f32.mrf.mxu0
        %v760 = vadd.f32 0.0, %v759
        %761 = vdwg.mxu0
        %762 = vmatpush.msra.mxu0 %v470
        %763 = vmatpush.msra.mxu0 %v469
        %764 = vmatpush.msra.mxu0 %v468
        %765 = vmatpush.msra.mxu0 %v467
        %766 = vmatpush.msra.mxu0 %v466
        %767 = vmatpush.msra.mxu0 %v465
        %768 = vmatpush.msra.mxu0 %v464
        %769 = vmatpush.msra.mxu0 %v463
        %770 = vmatpush.msra.mxu0 %v462
        %771 = vmatpush.msra.mxu0 %v461
        %772 = vmatpush.msra.mxu0 %v460
        %773 = vmatpush.msra.mxu0 %v459
        %774 = vmatpush.msra.mxu0 %v458
        %775 = vmatpush.msra.mxu0 %v457
        %776 = vmatpush.msra.mxu0 %v456
        %777 = vmatpush.msra.mxu0 %v455
        %778 = vmatmul.f32.gmra.mxu0 %v740
        %v779 = vpop.f32.mrf.mxu0
        %v780 = vadd.f32 %v760, %v779
        %781 = vdwg.mxu0
        %vm782 = vcmask 523264
        %v783 = vsel %vm782, %v780, 0.0
        %784 = vadd.xlane.f32.xlu0 %v783
        %v785 = vpop.xlane.xlu0 %784
        %v786 = vmul.f32 %v785, 0.015625
        %v787 = vmul.f32 %v780, %v780
        %v788 = vsel %vm782, %v787, 0.0
        %789 = vadd.xlane.f32.xlu0 %v788
        %v790 = vpop.xlane.xlu0 %789
        %v791 = vmul.f32 %v790, 0.015625
        %v792 = vmul.f32 %v786, %v786
        %v793 = vsub.f32 %v791, %v792
        %v794 = vsub.f32 %v780, %v786
        %v795 = vadd.f32 %v793, 1e-05
        %v796 = vrsqrt.pop %v795
        %v797 = vmul.f32 %v796, %v795
        %v798 = vmul.f32 %v797, %v796
        %v799 = vmul.f32 0.5, %v798
        %v800 = vsub.f32 1.5, %v799
        %v801 = vmul.f32 %v796, %v800
        %vm802 = vweird.f32 %v795
        %vm803 = vweird.f32 %v796
        %vm804 = vmor %vm802, %vm803
        %v805 = vsel %vm804, %v796, %v801
        %v806 = vmul.f32 %v794, %v805
        %v807 = vld [vmem:[%s8] sm:$0xff]
        %809 = vset.pattern.permute.xlu0 0
        %810 = vperm.xlu0 %809, %v807
        %v811 = vpop.permute.xlu0 %810
        %v813 = vmul.f32 %v806, %v811
        %v814 = vld [vmem:[%s9] sm:$0xff]
        %816 = vset.pattern.permute.xlu0 0
        %817 = vperm.xlu0 %816, %v814
        %v818 = vpop.permute.xlu0 %817
        %v820 = vadd.f32 %v813, %v818
        %v821 = vmul.f32 %v820, 0.2
        %v822 = vmax.f32 %v820, %v821
        %vm823 = vcmask 1048064
        %824 = vrot.lane.b32.xlu0 %v822, 64
        %v825 = vpop.permute.xlu0 %824
        %v826 = vsel %vm823, %v825, %v822
        %827 = vrot.lane.b32.xlu0 %v826, 64
        %v828 = vpop.permute.xlu0 %827
        %v829 = vsel %vm823, %v828, %v822
        %v830 = vld [vmem:[%s11] sm:$0x1]
        %v831 = vperm.slane %v830, 0
        %833 = vrot.lane.b32.xlu0 %v831, 55
        %v834 = vpop.permute.xlu0 %833
        %v836 = vmul.f32 %v829, %v834
        %v837 = vld [vmem:[%s11 + $0x1] sm:$0x1]
        %v838 = vperm.slane %v837, 0
        %840 = vrot.lane.b32.xlu0 %v838, 56
        %v841 = vpop.permute.xlu0 %840
        %v843 = vmul.f32 %v829, %v841
        %v844 = vld [vmem:[%s11 + $0x2] sm:$0x1]
        %v845 = vperm.slane %v844, 0
        %847 = vrot.lane.b32.xlu0 %v845, 57
        %v848 = vpop.permute.xlu0 %847
        %v850 = vmul.f32 %v829, %v848
        %v851 = vld [vmem:[%s11 + $0x3] sm:$0x1]
        %v852 = vperm.slane %v851, 0
        %854 = vrot.lane.b32.xlu0 %v852, 63
        %v855 = vpop.permute.xlu0 %854
        %v857 = vmul.f32 %v829, %v855
        %v858 = vld [vmem:[%s11 + $0x5] sm:$0x1]
        %v859 = vperm.slane %v858, 0
        %861 = vrot.lane.b32.xlu0 %v859, 1
        %v862 = vpop.permute.xlu0 %861
        %v864 = vmul.f32 %v829, %v862
        %v865 = vld [vmem:[%s11 + $0x6] sm:$0x1]
        %v866 = vperm.slane %v865, 0
        %868 = vrot.lane.b32.xlu0 %v866, 7
        %v869 = vpop.permute.xlu0 %868
        %v871 = vmul.f32 %v829, %v869
        %v872 = vld [vmem:[%s11 + $0x7] sm:$0x1]
        %v873 = vperm.slane %v872, 0
        %875 = vrot.lane.b32.xlu0 %v873, 8
        %v876 = vpop.permute.xlu0 %875
        %v878 = vmul.f32 %v829, %v876
        %v879 = vld [vmem:[%s11 + $0x8] sm:$0x1]
        %v880 = vperm.slane %v879, 0
        %882 = vrot.lane.b32.xlu0 %v880, 9
        %v883 = vpop.permute.xlu0 %882
        %v885 = vmul.f32 %v829, %v883
        %v886 = vld [vmem:[%s3] sm:$0xff]
        %v887 = vld [vmem:[%s3 + $0x8] sm:$0xff]
        %889 = vrot.lane.b32.xlu0 %v843, 127
        %v890 = vpop.permute.xlu0 %889
        %892 = vrot.lane.b32.xlu0 %v850, 126
        %v893 = vpop.permute.xlu0 %892
        %895 = vrot.lane.b32.xlu0 %v857, 120
        %v896 = vpop.permute.xlu0 %895
        %898 = vrot.lane.b32.xlu0 %v822, 55
        %v899 = vpop.permute.xlu0 %898
        %901 = vrot.lane.b32.xlu0 %v864, 54
        %v902 = vpop.permute.xlu0 %901
        %904 = vrot.lane.b32.xlu0 %v871, 48
        %v905 = vpop.permute.xlu0 %904
        %907 = vrot.lane.b32.xlu0 %v878, 47
        %v908 = vpop.permute.xlu0 %907
        %910 = vrot.lane.b32.xlu0 %v885, 46
        %v911 = vpop.permute.xlu0 %910
        %v912 = vld [vmem:[%s4] sm:$0xff]
        %v913 = vld [vmem:[%s4 + $0x8] sm:$0xff]
        %915 = vset.pattern.permute.xlu0 0
        %916 = vperm.xlu0 %915, %v912
        %v917 = vpop.permute.xlu0 %916
        %920 = vset.pattern.permute.xlu0 0
        %921 = vperm.xlu0 %920, %v913
        %v922 = vpop.permute.xlu0 %921
        %925 = vrot.lane.b32.xlu0 %v836, 73
        %v926 = vpop.permute.xlu0 %925
        %927 = vrot.lane.b32.xlu0 %v890, 73
        %v928 = vpop.permute.xlu0 %927
        %929 = vrot.lane.b32.xlu0 %v893, 73
        %v930 = vpop.permute.xlu0 %929
        %931 = vrot.lane.b32.xlu0 %v896, 73
        %v932 = vpop.permute.xlu0 %931
        %933 = vrot.lane.b32.xlu0 %v899, 73
        %v934 = vpop.permute.xlu0 %933
        %935 = vrot.lane.b32.xlu0 %v902, 73
        %v936 = vpop.permute.xlu0 %935
        %937 = vrot.lane.b32.xlu0 %v905, 73
        %v938 = vpop.permute.xlu0 %937
        %939 = vrot.lane.b32.xlu0 %v908, 73
        %v940 = vpop.permute.xlu0 %939
        %941 = vrot.lane.b32.xlu0 %v911, 73
        %v942 = vpop.permute.xlu0 %941
        %v953 = vsel %vm698, %v886, 0
        %v956 = vsel %vm698, %v887, 0
        %958 = vmatpush.msra.mxu0 0.0
        %959 = vmatpush.msra.mxu0 0.0
        %960 = vmatpush.msra.mxu0 0.0
        %961 = vmatpush.msra.mxu0 0.0
        %962 = vmatpush.msra.mxu0 0.0
        %963 = vmatpush.msra.mxu0 0.0
        %964 = vmatpush.msra.mxu0 0.0
        %965 = vmatpush.msra.mxu0 %v942
        %966 = vmatpush.msra.mxu0 %v940
        %967 = vmatpush.msra.mxu0 %v938
        %968 = vmatpush.msra.mxu0 %v936
        %969 = vmatpush.msra.mxu0 %v934
        %970 = vmatpush.msra.mxu0 %v932
        %971 = vmatpush.msra.mxu0 %v930
        %972 = vmatpush.msra.mxu0 %v928
        %973 = vmatpush.msra.mxu0 %v926
        %974 = vmatmul.f32.gmra.mxu0 %v953
        %v975 = vpop.f32.mrf.mxu0
        %v976 = vadd.f32 %v917, %v975
        %977 = vmatmul.f32.gmra.mxu0 %v956
        %v978 = vpop.f32.mrf.mxu0
        %v979 = vadd.f32 %v922, %v978
        %980 = vdwg.mxu0
        %vm981 = vcmask 64512
        %v983 = vsel %vm981, %v513, 0
        %v986 = vsel %vm981, %v514, 0
        %988 = vmatpush.msra.mxu0 0.0
        %989 = vmatpush.msra.mxu0 0.0
        %990 = vmatpush.msra.mxu0 0.0
        %991 = vmatpush.msra.mxu0 0.0
        %992 = vmatpush.msra.mxu0 0.0
        %993 = vmatpush.msra.mxu0 0.0
        %994 = vmatpush.msra.mxu0 0.0
        %995 = vmatpush.msra.mxu0 0.0
        %996 = vmatpush.msra.mxu0 0.0
        %997 = vmatpush.msra.mxu0 0.0
        %998 = vmatpush.msra.mxu0 0.0
        %999 = vmatpush.msra.mxu0 0.0
        %1000 = vmatpush.msra.mxu0 0.0
        %1001 = vmatpush.msra.mxu0 0.0
        %1002 = vmatpush.msra.mxu0 0.0
        %1003 = vmatpush.msra.mxu0 %v511
        %1004 = vmatmul.f32.gmra.mxu0 %v983
        %v1005 = vpop.f32.mrf.mxu0
        %v1006 = vadd.f32 %v976, %v1005
        %1007 = vmatmul.f32.gmra.mxu0 %v986
        %v1008 = vpop.f32.mrf.mxu0
        %v1009 = vadd.f32 %v979, %v1008
        %1010 = vdwg.mxu0
        %v1011 = vmul.f32 %v1006, 0.70710677
        %v1012 = vmul.f32 %v1009, 0.70710677
        %1013 = vst.msk [vmem:[%s433] sm:$0xff] %vm782, %v1011
        %1014 = vst.msk [vmem:[%s433 + $0x8] sm:$0xff] %vm782, %v1012
        %s1015 = sand.u32 %s313, 1
        %s1016 = scalar_lea.sflag [#allocation3], %s1015
        %s1017 = sand.u32 %s313, 1
        %s1018 = smul.addr %s1017, 16
        %s1019 = scalar_lea.vmem [#allocation2], %s1018
        // Predicated region
        $region73: #{tpu_custom_call.1} parent=71 // pred_check
          %p1020 = pneg %p323
        $region74: #{tpu_custom_call.1} parent=71 // pred_check_branch
          %1022 = sbr.rel (%p1020) target = $region76
        $region75: #{tpu_custom_call.1} parent=71 // pred_region
          %1024 = vsyncadd %s1016, 0
          %s1025 = smul.addr %s27, 2
          %s1026 = smul.addr %s1025, 8
          %s1027 = scalar_lea.hbm %s13, %s1026
          %s1028 = sshll.u32 %s1019, 4
          %s1029 = int_to_ptr.vmem [resolvable:$true] %s1028
          %s1030 = sshll.u32 %s1027, 4
          %s1031 = int_to_ptr.hbm [resolvable:$true] %s1030
          %1036 = dma.vmem_to_hbm [thread:$0]  %s1029, 256, %s1031, %s1016, 128, 128, 8
        $region76: #{tpu_custom_call.1} parent=71 // pred_fallthru
          _
      $region72: #{tpu_custom_call.1} parent=5 // pred_fallthru
        _
      %p1037 = scmp.le.s32.totalorder 2, %s22
      // Predicated region
      $region77: #{tpu_custom_call.1} parent=5 // pred_check
        %p1038 = pneg %p1037
      $region78: #{tpu_custom_call.1} parent=5 // pred_check_branch
        %1040 = sbr.rel (%p1038) target = $region80
      $region79: #{tpu_custom_call.1} parent=5 // pred_region
        %s1041 = ssub.s32 %s22, 2
        // Predicated region
        $region81: #{tpu_custom_call.1} parent=79 // pred_check
          %p1042 = pneg %p329
        $region82: #{tpu_custom_call.1} parent=79 // pred_check_branch
          %1044 = sbr.rel (%p1042) target = $region84
        $region83: #{tpu_custom_call.1} parent=79 // pred_region
          %s1045 = sand.u32 %s314, 1
          %s1046 = scalar_lea.sflag [#allocation3], %s1045
          %s1047 = sand.u32 %s314, 1
          %s1048 = smul.addr %s1047, 16
          %s1049 = scalar_lea.vmem [#allocation2], %s1048
          %1051 = dma.done %s1046, 256
        $region84: #{tpu_custom_call.1} parent=79 // pred_fallthru
          _
      $region80: #{tpu_custom_call.1} parent=5 // pred_fallthru
        _
    $region6: #{tpu_custom_call.1} parent=1 // loop_footer
      %s26 = sadd.s32 1, %s22
    $region7: #{tpu_custom_call.1} parent=1 // loop_footer_branch
      %21 = sbr.rel target = $region3
    $region8: #{tpu_custom_call.1} parent=1 // loop_exit
      _
    %1052 = vsyncpa [#allocation3], 1
    %s1053 = scalar_lea.sflag [#allocation3], 1
    %1054 = vsyncpa %s1053, 1

</llo_original>
